<compile_context>
chip_gen: v5e
topology: v5e:2x2
jax: 0.10.0
libtpu: 0.0.40
codegen_flags: <defaults>
</compile_context>

<pallas_src>
import functools

import numpy as np
import jax
import jax.numpy as jnp
from jax import lax
from jax.experimental import pallas as pl
from jax.experimental.pallas import tpu as pltpu


LEAKY_SLOPE = 0.01     # nn.LeakyReLU default negative_slope
COS_EPS = 0.001        # nn.CosineSimilarity eps (as configured in LearnerHead)
THRESHOLD = 0.1        # nn.Threshold(threshold, 0)


def _round_up(x, m):
    return (x + m - 1) // m * m


def _graph_learner_kernel(n_heads, d_pad, inv_heads,
                          z_ref, w_ref, stack_ref, mean_ref,
                          h_scr, ht_scr):
    """One (batch, head) grid step.

    z_ref:     (1, Np, F)      node features of batch b (resident across h)
    w_ref:     (F, H*Dp)       packed, lane-padded head weights (DMA'd once)
    stack_ref: (1, 1, Np, Np)  this head's slice of b_adj_
    mean_ref:  (1, Np, Np)     head-mean accumulator (resident across h)
    h_scr:     (H, Np, Dp)     per-head projections (filled at h == 0)
    ht_scr:    (H, Dp, Np)     their transposes      (filled at h == 0)
    """
    h_idx = pl.program_id(1)

    @pl.when(h_idx == 0)
    def _init():
        z = z_ref[0]                                               # (Np, F)
        # One packed MXU matmul for all heads.
        h_all = jnp.dot(z, w_ref[...],
                        preferred_element_type=jnp.float32)        # (Np, H*Dp)
        # LeakyReLU
        h_all = jnp.where(h_all > 0, h_all, LEAKY_SLOPE * h_all)
        for head in range(n_heads):         # static unroll; slices lane-aligned
            hs = h_all[:, head * d_pad:(head + 1) * d_pad]         # (Np, Dp)
            h_scr[head] = hs
            ht_scr[head] = hs.T
        mean_ref[...] = jnp.zeros_like(mean_ref)

    h = h_scr[h_idx]                                               # (Np, Dp)
    hT = ht_scr[h_idx]                                             # (Dp, Np)

    # Gram matrix in canonical (M,K)x(K,N) form — no per-head transpose needed.
    w12 = lax.dot_general(h, hT, (((1,), (0,)), ((), ())),
                          preferred_element_type=jnp.float32)      # (Np, Np)
    sq_col = jnp.sum(h * h, axis=-1, keepdims=True)                # (Np, 1)
    sq_row = jnp.sum(hT * hT, axis=0, keepdims=True)               # (1, Np)
    # 1 / max(||hi||*||hj||, eps) == rsqrt(max(sq_i*sq_j, eps^2))
    denom_sq = jnp.maximum(sq_col * sq_row, COS_EPS * COS_EPS)
    adj = jnp.abs(w12) * lax.rsqrt(denom_sq)                       # |cos sim|
    # nn.Threshold(threshold, 0): keep x if x > threshold else 0
    adj = jnp.where(adj > THRESHOLD, adj, 0.0)

    stack_ref[0, 0] = adj.astype(stack_ref.dtype)
    mean_ref[0] += (adj * inv_heads).astype(mean_ref.dtype)


@jax.jit
def graph_learner_heads(b_het_z, W_stack):
    """Per-head adjacency stack (H,B,N,N) and head-mean (B,N,N) in one kernel."""
    H, F, D = W_stack.shape
    B, N, Fz = b_het_z.shape
    assert F == Fz

    Dp = _round_up(D, 128)      # lane-align each head's projection
    Np = _round_up(N, 128)      # lane-dense adjacency stores

    # Zero-padding is exact: padded feature columns / node rows contribute 0 to
    # the Gram matrix and squared norms; padded adjacency entries threshold to 0.
    w_pad = jnp.pad(W_stack.astype(jnp.float32), ((0, 0), (0, 0), (0, Dp - D)))
    w_packed = jnp.transpose(w_pad, (1, 0, 2)).reshape(F, H * Dp)   # (F, H*Dp)
    z_pad = jnp.pad(b_het_z.astype(jnp.float32), ((0, 0), (0, Np - N), (0, 0)))

    kernel = functools.partial(_graph_learner_kernel, H, Dp, 1.0 / H)

    stack, mean = pl.pallas_call(
        kernel,
        out_shape=(jax.ShapeDtypeStruct((H, B, Np, Np), jnp.float32),
                   jax.ShapeDtypeStruct((B, Np, Np), jnp.float32)),
        grid_spec=pltpu.PrefetchScalarGridSpec(
            num_scalar_prefetch=0,
            grid=(B, H),                                        # H innermost
            in_specs=[
                pl.BlockSpec((1, Np, F), lambda b, h: (b, 0, 0)),    # z[b], resident over h
                pl.BlockSpec((F, H * Dp), lambda b, h: (0, 0)),      # packed W, DMA'd once
            ],
            out_specs=[
                pl.BlockSpec((1, 1, Np, Np), lambda b, h: (h, b, 0, 0)),  # b_adj_ slice
                pl.BlockSpec((1, Np, Np), lambda b, h: (b, 0, 0)),        # b_adj (resident over h)
            ],
            scratch_shapes=[
                pltpu.VMEM((H, Np, Dp), jnp.float32),   # per-head projections
                pltpu.VMEM((H, Dp, Np), jnp.float32),   # their transposes
            ],
        ),
        compiler_params=pltpu.CompilerParams(
            dimension_semantics=("parallel", "arbitrary")),
        # TODO(synk): for very large N add a row-tile grid axis (B, R, H) with
        # lhs tile (TN, Dp) and set vmem_limit_bytes so the (Np, Np) blocks
        # stay under v7x's 64 MiB VMEM.
    )(z_pad, w_packed)

    return stack[:, :, :N, :N], mean[:, :N, :N]


def xavier_uniform(key, shape, gain):
    fan_in, fan_out = shape
    limit = gain * np.sqrt(6.0 / (fan_in + fan_out))
    return jax.random.uniform(key, shape, jnp.float32, -limit, limit)


def graph_learner_forward(processed_input, W_stack):
    """Full GraphLearner.forward."""
    b_z, b_het_z, edge_types = processed_input
    b_size, n_nodes, n_feats = b_z.shape

    # Hot path (Pallas): per-head stack + fused head-mean.
    b_adj_, b_adj = graph_learner_heads(b_het_z, W_stack)   # (H,B,N,N), (B,N,N)

    # dense_to_sparse (torch_geometric semantics): exact, data-dependent edge
    # count → one scalar host sync; the compaction itself stays on device
    # (row-major jnp.nonzero order matches torch.nonzero).
    # TODO(synk): replace with static-capacity extraction (size=B*N*N, padded)
    # to avoid the host sync if callers can tolerate padded edge arrays.
    n_edges = int(jnp.count_nonzero(b_adj))
    b_idx, r_idx, c_idx = jnp.nonzero(b_adj, size=n_edges)
    r = b_idx * n_nodes + r_idx
    c = b_idx * n_nodes + c_idx
    b_edge_index = jnp.stack([r, c], axis=0).astype(jnp.int32)
    b_edge_weights = b_adj[b_idx, r_idx, c_idx].astype(jnp.float32)
    # r % n_nodes == r_idx, c % n_nodes == c_idx
    b_edge_types = edge_types[r_idx, c_idx]

    b_z_flat = b_z.reshape(b_size * n_nodes, n_feats)

    assert b_edge_index.shape == (2, n_edges)
    assert b_edge_types.shape == (n_edges,)
    assert b_edge_weights.shape == (n_edges,)
    assert b_z_flat.shape == (b_size * n_nodes, n_feats)
    assert b_adj.shape == (b_size, n_nodes, n_nodes)

    return ((b_z_flat, b_adj, b_edge_index, b_edge_weights, b_edge_types),
            b_adj_)


def _reference_heads(b_het_z, W_stack):
    """Pure-JAX reference of the per-head adjacency stack (for verification)."""
    h = jnp.einsum('bnf,hfd->hbnd', b_het_z, W_stack)
    h = jnp.where(h > 0, h, LEAKY_SLOPE * h)
    num = jnp.einsum('hbnd,hbmd->hbnm', h, h)
    nrm = jnp.sqrt(jnp.sum(h * h, axis=-1))
    denom = jnp.maximum(nrm[..., :, None] * nrm[..., None, :], COS_EPS)
    adj = jnp.abs(num / denom)
    return jnp.where(adj > THRESHOLD, adj, 0.0)


if __name__ == "__main__":
    # Small, deterministic example shapes.
    B, N = 2, 8            # batch, nodes
    N_IN, N_OUT = 16, 10   # n_in_feats, n_out_feats
    N_HEADS = 3

    key = jax.random.PRNGKey(0)
    k_z, k_hz, k_et, k_w = jax.random.split(key, 4)

    b_z = jax.random.normal(k_z, (B, N, N_IN), dtype=jnp.float32)
    b_het_z = jax.random.normal(k_hz, (B, N, N_IN), dtype=jnp.float32)
    edge_types = jax.random.randint(k_et, (N, N), 0, 5, dtype=jnp.int32)

    # Per-head weights, xavier_uniform with gain=1.414 (deterministic).
    w_keys = jax.random.split(k_w, N_HEADS)
    W_stack = jnp.stack(
        [xavier_uniform(wk, (N_IN, N_OUT), gain=1.414) for wk in w_keys])

    (outs, b_adj_) = graph_learner_forward((b_z, b_het_z, edge_types), W_stack)
    b_z_flat, b_adj, b_edge_index, b_edge_weights, b_edge_types = outs

    jax.block_until_ready(b_adj_)
    jax.block_until_ready(b_adj)
    jax.block_until_ready(b_z_flat)
    jax.block_until_ready(b_edge_weights)

    # Lightweight correctness check against a pure-JAX reference.
    ref_stack = _reference_heads(b_het_z, W_stack)
    np.testing.assert_allclose(np.asarray(b_adj_), np.asarray(ref_stack),
                               rtol=2e-5, atol=2e-5)
    np.testing.assert_allclose(np.asarray(b_adj),
                               np.asarray(jnp.mean(ref_stack, axis=0)),
                               rtol=2e-5, atol=2e-5)

    print("KERNEL_OK")
</pallas_src>

<mosaic_0001>
module attributes {stable_mosaic.version = 11 : i64} {
  func.func @_graph_learner_kernel(%arg0: i32, %arg1: i32, %arg2: memref<1x128x16xf32, #tpu.memory_space<vmem>>, %arg3: memref<16x384xf32, #tpu.memory_space<vmem>>, %arg4: memref<1x1x128x128xf32, #tpu.memory_space<vmem>>, %arg5: memref<1x128x128xf32, #tpu.memory_space<vmem>>, %arg6: memref<3x128x128xf32, #tpu.memory_space<vmem>>, %arg7: memref<3x128x128xf32, #tpu.memory_space<vmem>>) attributes {dimension_semantics = [#tpu.dimension_semantics<parallel>, #tpu.dimension_semantics<arbitrary>], iteration_bounds = array<i64: 2, 3>, scalar_prefetch = 0 : i64, scratch_operands = 2 : i64, tpu.core_type = #tpu.core_type<tc>, window_params = [{transform_indices = @transform_0, window_bounds = array<i64: 1, 128, 16>}, {pipeline_mode = #tpu.pipeline_mode<synchronous>, transform_indices = @transform_1, window_bounds = array<i64: 16, 384>}, {transform_indices = @transform_2, window_bounds = array<i64: 1, 1, 128, 128>}, {transform_indices = @transform_3, window_bounds = array<i64: 1, 128, 128>}]} {
    %c0_i32 = arith.constant 0 : i32
    %0 = arith.cmpi eq, %arg1, %c0_i32 : i32
    %1 = arith.extui %0 : i1 to i32
    %c0_i32_0 = arith.constant 0 : i32
    %2 = arith.cmpi ne, %1, %c0_i32_0 : i32
    scf.if %2 {
      %c0_20 = arith.constant 0 : index
      %c0_21 = arith.constant 0 : index
      %c0_22 = arith.constant 0 : index
      %39 = vector.load %arg2[%c0_20, %c0_21, %c0_22] : memref<1x128x16xf32, #tpu.memory_space<vmem>>, vector<1x128x16xf32>
      %40 = vector.shape_cast %39 : vector<1x128x16xf32> to vector<128x16xf32>
      %c0_23 = arith.constant 0 : index
      %c0_24 = arith.constant 0 : index
      %41 = vector.load %arg3[%c0_23, %c0_24] : memref<16x384xf32, #tpu.memory_space<vmem>>, vector<16x384xf32>
      %cst_25 = arith.constant dense<0.000000e+00> : vector<128x384xf32>
      %42 = tpu.matmul %40, %41, %cst_25 {dimension_numbers = #tpu.dot_dimension_numbers<[1], [0], [0], [1], [0, 0, 1, 1], [], []>} : vector<128x16xf32>, vector<16x384xf32>, vector<128x384xf32> -> vector<128x384xf32>
      %cst_26 = arith.constant 0.000000e+00 : f32
      %43 = vector.broadcast %cst_26 : f32 to vector<128x384xf32>
      %44 = arith.cmpf ogt, %42, %43 : vector<128x384xf32>
      %cst_27 = arith.constant 0.00999999977 : f32
      %45 = vector.broadcast %cst_27 : f32 to vector<128x384xf32>
      %46 = arith.mulf %45, %42 : vector<128x384xf32>
      %47 = arith.select %44, %42, %46 : vector<128x384xi1>, vector<128x384xf32>
      %48 = vector.extract_strided_slice %47 {offsets = [0, 0], sizes = [128, 128], strides = [1, 1]} : vector<128x384xf32> to vector<128x128xf32>
      %c0_28 = arith.constant 0 : index
      %c0_29 = arith.constant 0 : index
      %c0_30 = arith.constant 0 : index
      %49 = vector.load %arg6[%c0_28, %c0_29, %c0_30] : memref<3x128x128xf32, #tpu.memory_space<vmem>>, vector<1x128x128xf32>
      %50 = vector.shape_cast %49 : vector<1x128x128xf32> to vector<128x128xf32>
      %51 = vector.shape_cast %48 : vector<128x128xf32> to vector<1x128x128xf32>
      tpu.vector_store %arg6[%c0_28, %c0_29, %c0_30], %51 {strides = array<i32>} : memref<3x128x128xf32, #tpu.memory_space<vmem>>, vector<1x128x128xf32>,
      %52 = tpu.transpose %48, [1, 0] : vector<128x128xf32> -> vector<128x128xf32>
      %c0_31 = arith.constant 0 : index
      %c0_32 = arith.constant 0 : index
      %c0_33 = arith.constant 0 : index
      %53 = vector.load %arg7[%c0_31, %c0_32, %c0_33] : memref<3x128x128xf32, #tpu.memory_space<vmem>>, vector<1x128x128xf32>
      %54 = vector.shape_cast %53 : vector<1x128x128xf32> to vector<128x128xf32>
      %55 = vector.shape_cast %52 : vector<128x128xf32> to vector<1x128x128xf32>
      tpu.vector_store %arg7[%c0_31, %c0_32, %c0_33], %55 {strides = array<i32>} : memref<3x128x128xf32, #tpu.memory_space<vmem>>, vector<1x128x128xf32>,
      %56 = vector.extract_strided_slice %47 {offsets = [0, 128], sizes = [128, 128], strides = [1, 1]} : vector<128x384xf32> to vector<128x128xf32>
      %c1 = arith.constant 1 : index
      %c0_34 = arith.constant 0 : index
      %c0_35 = arith.constant 0 : index
      %57 = vector.load %arg6[%c1, %c0_34, %c0_35] : memref<3x128x128xf32, #tpu.memory_space<vmem>>, vector<1x128x128xf32>
      %58 = vector.shape_cast %57 : vector<1x128x128xf32> to vector<128x128xf32>
      %59 = vector.shape_cast %56 : vector<128x128xf32> to vector<1x128x128xf32>
      tpu.vector_store %arg6[%c1, %c0_34, %c0_35], %59 {strides = array<i32>} : memref<3x128x128xf32, #tpu.memory_space<vmem>>, vector<1x128x128xf32>,
      %60 = tpu.transpose %56, [1, 0] : vector<128x128xf32> -> vector<128x128xf32>
      %c1_36 = arith.constant 1 : index
      %c0_37 = arith.constant 0 : index
      %c0_38 = arith.constant 0 : index
      %61 = vector.load %arg7[%c1_36, %c0_37, %c0_38] : memref<3x128x128xf32, #tpu.memory_space<vmem>>, vector<1x128x128xf32>
      %62 = vector.shape_cast %61 : vector<1x128x128xf32> to vector<128x128xf32>
      %63 = vector.shape_cast %60 : vector<128x128xf32> to vector<1x128x128xf32>
      tpu.vector_store %arg7[%c1_36, %c0_37, %c0_38], %63 {strides = array<i32>} : memref<3x128x128xf32, #tpu.memory_space<vmem>>, vector<1x128x128xf32>,
      %64 = vector.extract_strided_slice %47 {offsets = [0, 256], sizes = [128, 128], strides = [1, 1]} : vector<128x384xf32> to vector<128x128xf32>
      %c2 = arith.constant 2 : index
      %c0_39 = arith.constant 0 : index
      %c0_40 = arith.constant 0 : index
      %65 = vector.load %arg6[%c2, %c0_39, %c0_40] : memref<3x128x128xf32, #tpu.memory_space<vmem>>, vector<1x128x128xf32>
      %66 = vector.shape_cast %65 : vector<1x128x128xf32> to vector<128x128xf32>
      %67 = vector.shape_cast %64 : vector<128x128xf32> to vector<1x128x128xf32>
      tpu.vector_store %arg6[%c2, %c0_39, %c0_40], %67 {strides = array<i32>} : memref<3x128x128xf32, #tpu.memory_space<vmem>>, vector<1x128x128xf32>,
      %68 = tpu.transpose %64, [1, 0] : vector<128x128xf32> -> vector<128x128xf32>
      %c2_41 = arith.constant 2 : index
      %c0_42 = arith.constant 0 : index
      %c0_43 = arith.constant 0 : index
      %69 = vector.load %arg7[%c2_41, %c0_42, %c0_43] : memref<3x128x128xf32, #tpu.memory_space<vmem>>, vector<1x128x128xf32>
      %70 = vector.shape_cast %69 : vector<1x128x128xf32> to vector<128x128xf32>
      %71 = vector.shape_cast %68 : vector<128x128xf32> to vector<1x128x128xf32>
      tpu.vector_store %arg7[%c2_41, %c0_42, %c0_43], %71 {strides = array<i32>} : memref<3x128x128xf32, #tpu.memory_space<vmem>>, vector<1x128x128xf32>,
      %cst_44 = arith.constant 0.000000e+00 : f32
      %72 = vector.broadcast %cst_44 : f32 to vector<1x128x128xf32>
      %c0_45 = arith.constant 0 : index
      %c0_46 = arith.constant 0 : index
      %c0_47 = arith.constant 0 : index
      %73 = vector.load %arg5[%c0_45, %c0_46, %c0_47] : memref<1x128x128xf32, #tpu.memory_space<vmem>>, vector<1x128x128xf32>
      tpu.vector_store %arg5[%c0_45, %c0_46, %c0_47], %72 {strides = array<i32>} : memref<1x128x128xf32, #tpu.memory_space<vmem>>, vector<1x128x128xf32>,
    } else {
    }
    %3 = arith.index_cast %arg1 : i32 to index
    %c0 = arith.constant 0 : index
    %c0_1 = arith.constant 0 : index
    %4 = vector.load %arg6[%3, %c0, %c0_1] : memref<3x128x128xf32, #tpu.memory_space<vmem>>, vector<1x128x128xf32>
    %5 = vector.shape_cast %4 : vector<1x128x128xf32> to vector<128x128xf32>
    %6 = arith.index_cast %arg1 : i32 to index
    %c0_2 = arith.constant 0 : index
    %c0_3 = arith.constant 0 : index
    %7 = vector.load %arg7[%6, %c0_2, %c0_3] : memref<3x128x128xf32, #tpu.memory_space<vmem>>, vector<1x128x128xf32>
    %8 = vector.shape_cast %7 : vector<1x128x128xf32> to vector<128x128xf32>
    %cst = arith.constant dense<0.000000e+00> : vector<128x128xf32>
    %9 = tpu.matmul %5, %8, %cst {dimension_numbers = #tpu.dot_dimension_numbers<[1], [0], [0], [1], [0, 0, 1, 1], [], []>} : vector<128x128xf32>, vector<128x128xf32>, vector<128x128xf32> -> vector<128x128xf32>
    %10 = arith.mulf %5, %5 : vector<128x128xf32>
    %cst_4 = arith.constant dense<0.000000e+00> : vector<128xf32>
    %11 = vector.multi_reduction <add>, %10, %cst_4 [1] : vector<128x128xf32> to vector<128xf32>
    %12 = vector.shape_cast %11 : vector<128xf32> to vector<128x1xf32>
    %13 = arith.mulf %8, %8 : vector<128x128xf32>
    %cst_5 = arith.constant dense<0.000000e+00> : vector<128xf32>
    %14 = vector.multi_reduction <add>, %13, %cst_5 [0] : vector<128x128xf32> to vector<128xf32>
    %15 = vector.shape_cast %14 : vector<128xf32> to vector<1x128xf32>
    %16 = vector.broadcast %12 : vector<128x1xf32> to vector<128x128xf32>
    %17 = vector.broadcast %15 : vector<1x128xf32> to vector<128x128xf32>
    %18 = arith.mulf %16, %17 : vector<128x128xf32>
    %cst_6 = arith.constant 9.99999997E-7 : f32
    %19 = vector.broadcast %cst_6 : f32 to vector<128x128xf32>
    %20 = arith.maximumf %18, %19 : vector<128x128xf32>
    %21 = math.absf %9 : vector<128x128xf32>
    %22 = math.rsqrt %20 : vector<128x128xf32>
    %23 = arith.mulf %21, %22 : vector<128x128xf32>
    %cst_7 = arith.constant 1.000000e-01 : f32
    %24 = vector.broadcast %cst_7 : f32 to vector<128x128xf32>
    %25 = arith.cmpf ogt, %23, %24 : vector<128x128xf32>
    %cst_8 = arith.constant 0.000000e+00 : f32
    %26 = vector.broadcast %cst_8 : f32 to vector<128x128xf32>
    %27 = arith.select %25, %23, %26 : vector<128x128xi1>, vector<128x128xf32>
    %c0_9 = arith.constant 0 : index
    %c0_10 = arith.constant 0 : index
    %c0_11 = arith.constant 0 : index
    %c0_12 = arith.constant 0 : index
    %28 = vector.load %arg4[%c0_9, %c0_10, %c0_11, %c0_12] : memref<1x1x128x128xf32, #tpu.memory_space<vmem>>, vector<1x1x128x128xf32>
    %29 = vector.shape_cast %28 : vector<1x1x128x128xf32> to vector<128x128xf32>
    %30 = vector.shape_cast %27 : vector<128x128xf32> to vector<1x1x128x128xf32>
    tpu.vector_store %arg4[%c0_9, %c0_10, %c0_11, %c0_12], %30 {strides = array<i32>} : memref<1x1x128x128xf32, #tpu.memory_space<vmem>>, vector<1x1x128x128xf32>,
    %c0_13 = arith.constant 0 : index
    %c0_14 = arith.constant 0 : index
    %c0_15 = arith.constant 0 : index
    %31 = vector.load %arg5[%c0_13, %c0_14, %c0_15] : memref<1x128x128xf32, #tpu.memory_space<vmem>>, vector<1x128x128xf32>
    %32 = vector.shape_cast %31 : vector<1x128x128xf32> to vector<128x128xf32>
    %cst_16 = arith.constant 0.333333343 : f32
    %33 = vector.broadcast %cst_16 : f32 to vector<128x128xf32>
    %34 = arith.mulf %27, %33 : vector<128x128xf32>
    %35 = arith.addf %32, %34 : vector<128x128xf32>
    %c0_17 = arith.constant 0 : index
    %c0_18 = arith.constant 0 : index
    %c0_19 = arith.constant 0 : index
    %36 = vector.load %arg5[%c0_17, %c0_18, %c0_19] : memref<1x128x128xf32, #tpu.memory_space<vmem>>, vector<1x128x128xf32>
    %37 = vector.shape_cast %36 : vector<1x128x128xf32> to vector<128x128xf32>
    %38 = vector.shape_cast %35 : vector<128x128xf32> to vector<1x128x128xf32>
    tpu.vector_store %arg5[%c0_17, %c0_18, %c0_19], %38 {strides = array<i32>} : memref<1x128x128xf32, #tpu.memory_space<vmem>>, vector<1x128x128xf32>,
    return
  }
  func.func @transform_0(%arg0: i32, %arg1: i32) -> (i32, i32, i32) {
    %c0_i32 = arith.constant 0 : i32
    %c0_i32_0 = arith.constant 0 : i32
    %c0_i32_1 = arith.constant 0 : i32
    return %arg0, %c0_i32, %c0_i32_0 : i32, i32, i32
  }
  func.func @transform_1(%arg0: i32, %arg1: i32) -> (i32, i32) {
    %c0_i32 = arith.constant 0 : i32
    %c0_i32_0 = arith.constant 0 : i32
    %c0_i32_1 = arith.constant 0 : i32
    return %c0_i32, %c0_i32_0 : i32, i32
  }
  func.func @transform_2(%arg0: i32, %arg1: i32) -> (i32, i32, i32, i32) {
    %c0_i32 = arith.constant 0 : i32
    %c0_i32_0 = arith.constant 0 : i32
    %c0_i32_1 = arith.constant 0 : i32
    return %arg1, %arg0, %c0_i32, %c0_i32_0 : i32, i32, i32, i32
  }
  func.func @transform_3(%arg0: i32, %arg1: i32) -> (i32, i32, i32) {
    %c0_i32 = arith.constant 0 : i32
    %c0_i32_0 = arith.constant 0 : i32
    %c0_i32_1 = arith.constant 0 : i32
    return %arg0, %c0_i32, %c0_i32_0 : i32, i32, i32
  }
}

</mosaic_0001>

<llo_original>
// kernel: graph_learner_heads.1
$region0: #{graph_learner_heads.1}
  #allocation0 [shape = 'u32[]', space=smem, size = 0x4, offset = 0x4, fixed_abs, tag = 'smem constant byte address 0x4 - core index']
  #allocation1 [shape = 'u32[72,128]{1,0:T(1,128)}', space=vmem, size = 0x9000, scoped, tag = 'internal scratch']
  #allocation2 [shape = 'f32[3,128,128]{2,1,0:T(8,128)}', space=vmem, size = 0x30000, scoped, tag = 'scratch operand']
  #allocation3 [shape = 'f32[3,128,128]{2,1,0:T(8,128)}', space=vmem, size = 0x30000, scoped, tag = 'scratch operand']
  %s0 = inlined_call_operand.vmem [shape: f32[2,128,16], index: 0, kind: input, shape index: {}]
  %s1 = inlined_call_operand.vmem [shape: f32[16,384], index: 1, kind: input, shape index: {}]
  %s2 = inlined_call_operand.vmem [shape: f32[3,2,128,128], index: 2, kind: output, shape index: {0}]
  %s3 = inlined_call_operand.vmem [shape: f32[2,128,128], index: 3, kind: output, shape index: {1}]
  %4 = xla_tuple %s2, %s3
  %s5 = sld [smem:[#allocation0]]
  $region53: #{graph_learner_heads.1} parent=0
    _
  %s7 = ssub.s32 1, %s5
  %s8 = scalar_select 0, %s7, %s5
  loop: start=0, step=1, limit=8
  $region2: #{graph_learner_heads.1} parent=0 // loop_pre_header
    _
  $region3: #{graph_learner_heads.1} parent=0 // loop_header
    %s10 = sphi 0, %s14
    %p11 = scmp.ge.s32.totalorder %s10, 8
    %s17 = sphi 0, %s29
    %s18 = sphi 0, %s25
    %s19 = sphi 0, %s17
    %s20 = sphi 0, %s18
    %s21 = sphi 0, %s19
    %s22 = sphi 0, %s20
    %s32 = sphi 0, %s34
    %s35 = sphi 0, %s32
    %s36 = sphi 0, %s35
    %s52 = sphi 0, %s36
    %s56 = sphi 0, %s56
    %s58 = sphi 0, %s56
    %s59 = sphi 0, %s58
    %s73 = sphi 0, %s59
    %s81 = sphi 0, %s83
    %s84 = sphi 0, %s81
    %s85 = sphi 0, %s84
    %s101 = sphi 0, %s85
    %s107 = sphi 0, %s109
    %s110 = sphi 0, %s107
    %s111 = sphi 0, %s110
    %s127 = sphi 0, %s111
  $region4: #{graph_learner_heads.1} parent=0 // loop_header_branch
    %13 = sbr.rel (%p11) target = $region8
  $region5: #{graph_learner_heads.1} parent=0 // loop_body
    %s15 = ssub.s32 %s10, 1
    %s16 = ssub.s32 %s10, 2
    %s23 = sadd.s32 1, %s18
    %p24 = scmp.ge.s32.totalorder %s23, 3
    %s25 = scalar_select %p24, 0, %s23
    %s26 = sadd.s32 1, %s17
    %s27 = scalar_select %p24, %s26, %s17
    %p28 = scmp.ge.s32.totalorder %s27, 2
    %s29 = scalar_select %p28, 0, %s27
    %s30 = ssub.s32 %s17, %s29
    %p31 = scmp.eq.s32.totalorder %s30, 0
    %s33 = sadd.s32 %s32, 1
    %s34 = scalar_select %p31, %s32, %s33
    %p37 = pneg %p31
    %p38 = scmp.eq.s32.totalorder %s10, 5
    %p39 = por %p37, %p38
    %p40 = scmp.ne.s32.totalorder %s32, %s35
    %p41 = scmp.eq.s32.totalorder %s10, 0
    %p42 = por %p40, %p41
    %p43 = scmp.ne.s32.totalorder %s32, %s35
    %p44 = scmp.eq.s32.totalorder %s15, 5
    %p45 = por %p43, %p44
    %p46 = scmp.ne.s32.totalorder %s35, %s36
    %p47 = scmp.eq.s32.totalorder %s15, 0
    %p48 = por %p46, %p47
    %p49 = scmp.ne.s32.totalorder %s35, %s36
    %p50 = scmp.eq.s32.totalorder %s16, 5
    %p51 = por %p49, %p50
    %p53 = scmp.ne.s32.totalorder %s36, %s52
    %p54 = scmp.eq.s32.totalorder %s16, 0
    %p55 = por %p53, %p54
    %s57 = sadd.s32 %s56, 1
    %p60 = scmp.eq.s32.totalorder %s10, 5
    %p61 = scmp.ne.s32.totalorder %s56, %s58
    %p62 = scmp.eq.s32.totalorder %s10, 0
    %p63 = por %p61, %p62
    %p64 = scmp.ne.s32.totalorder %s56, %s58
    %p65 = scmp.eq.s32.totalorder %s15, 5
    %p66 = por %p64, %p65
    %p67 = scmp.ne.s32.totalorder %s58, %s59
    %p68 = scmp.eq.s32.totalorder %s15, 0
    %p69 = por %p67, %p68
    %p70 = scmp.ne.s32.totalorder %s58, %s59
    %p71 = scmp.eq.s32.totalorder %s16, 5
    %p72 = por %p70, %p71
    %p74 = scmp.ne.s32.totalorder %s59, %s73
    %p75 = scmp.eq.s32.totalorder %s16, 0
    %p76 = por %p74, %p75
    %s77 = ssub.s32 %s18, %s25
    %s78 = ssub.s32 %s17, %s29
    %s79 = sor.u32 %s77, %s78
    %p80 = scmp.eq.s32.totalorder %s79, 0
    %s82 = sadd.s32 %s81, 1
    %s83 = scalar_select %p80, %s81, %s82
    %p86 = pneg %p80
    %p87 = scmp.eq.s32.totalorder %s10, 5
    %p88 = por %p86, %p87
    %p89 = scmp.ne.s32.totalorder %s81, %s84
    %p90 = scmp.eq.s32.totalorder %s10, 0
    %p91 = por %p89, %p90
    %p92 = scmp.ne.s32.totalorder %s81, %s84
    %p93 = scmp.eq.s32.totalorder %s15, 5
    %p94 = por %p92, %p93
    %p95 = scmp.ne.s32.totalorder %s84, %s85
    %p96 = scmp.eq.s32.totalorder %s15, 0
    %p97 = por %p95, %p96
    %p98 = scmp.ne.s32.totalorder %s84, %s85
    %p99 = scmp.eq.s32.totalorder %s16, 5
    %p100 = por %p98, %p99
    %p102 = scmp.ne.s32.totalorder %s85, %s101
    %p103 = scmp.eq.s32.totalorder %s16, 0
    %p104 = por %p102, %p103
    %s105 = ssub.s32 %s17, %s29
    %p106 = scmp.eq.s32.totalorder %s105, 0
    %s108 = sadd.s32 %s107, 1
    %s109 = scalar_select %p106, %s107, %s108
    %p112 = pneg %p106
    %p113 = scmp.eq.s32.totalorder %s10, 5
    %p114 = por %p112, %p113
    %p115 = scmp.ne.s32.totalorder %s107, %s110
    %p116 = scmp.eq.s32.totalorder %s10, 0
    %p117 = por %p115, %p116
    %p118 = scmp.ne.s32.totalorder %s107, %s110
    %p119 = scmp.eq.s32.totalorder %s15, 5
    %p120 = por %p118, %p119
    %p121 = scmp.ne.s32.totalorder %s110, %s111
    %p122 = scmp.eq.s32.totalorder %s15, 0
    %p123 = por %p121, %p122
    %p124 = scmp.ne.s32.totalorder %s110, %s111
    %p125 = scmp.eq.s32.totalorder %s16, 5
    %p126 = por %p124, %p125
    %p128 = scmp.ne.s32.totalorder %s111, %s127
    %p129 = scmp.eq.s32.totalorder %s16, 0
    %p130 = por %p128, %p129
    %p131 = scmp.le.s32.totalorder 1, %s10
    %p132 = scmp.lt.s32.totalorder %s10, 7
    %p133 = pnand %p131, %p132
    %p134 = pneg %p133
    // Predicated region
    $region9: #{graph_learner_heads.1} parent=5 // pred_check
      _
    $region10: #{graph_learner_heads.1} parent=5 // pred_check_branch
      %136 = sbr.rel (%p133) target = $region12
    $region11: #{graph_learner_heads.1} parent=5 // pred_region
      %s137 = ssub.s32 %s10, 1
      // Predicated region
      $region13: #{graph_learner_heads.1} parent=11 // pred_check
        %p138 = pneg %p69
      $region14: #{graph_learner_heads.1} parent=11 // pred_check_branch
        %140 = sbr.rel (%p138) target = $region16
      $region15: #{graph_learner_heads.1} parent=11 // pred_region
        _
      $region16: #{graph_learner_heads.1} parent=11 // pred_fallthru
        _
    $region12: #{graph_learner_heads.1} parent=5 // pred_fallthru
      _
    %p141 = scmp.lt.s32.totalorder %s10, 6
    // Predicated region
    $region17: #{graph_learner_heads.1} parent=5 // pred_check
      %p142 = pneg %p141
    $region18: #{graph_learner_heads.1} parent=5 // pred_check_branch
      %144 = sbr.rel (%p142) target = $region20
    $region19: #{graph_learner_heads.1} parent=5 // pred_region
      // Predicated region
      $region21: #{graph_learner_heads.1} parent=19 // pred_check
        %p145 = pneg %p42
      $region22: #{graph_learner_heads.1} parent=19 // pred_check_branch
        %147 = sbr.rel (%p145) target = $region24
      $region23: #{graph_learner_heads.1} parent=19 // pred_region
        %p148 = scmp.lt.s32.totalorder %s17, 1
        %s149 = scalar_select %p148, %s17, 1
        %s150 = smul.addr %s149, 16
        %s151 = smul.addr %s150, 8
        %s152 = scalar_lea.vmem %s0, %s151
      $region24: #{graph_learner_heads.1} parent=19 // pred_fallthru
        _
    $region20: #{graph_learner_heads.1} parent=5 // pred_fallthru
      _
    %p153 = scmp.le.s32.totalorder 1, %s10
    %p154 = scmp.lt.s32.totalorder %s10, 7
    %p155 = pnand %p153, %p154
    %p156 = pneg %p155
    // Predicated region
    $region25: #{graph_learner_heads.1} parent=5 // pred_check
      _
    $region26: #{graph_learner_heads.1} parent=5 // pred_check_branch
      %158 = sbr.rel (%p155) target = $region28
    $region27: #{graph_learner_heads.1} parent=5 // pred_region
      %s159 = ssub.s32 %s10, 1
      %p160 = scmp.lt.s32.totalorder %s19, 1
      %s161 = scalar_select %p160, %s19, 1
      %s162 = smul.addr %s161, 16
      %s163 = smul.addr %s162, 8
      %s164 = scalar_lea.vmem %s0, %s163
      %p165 = pneg %p48
      %p166 = pneg %p45
      %p167 = pneg %p69
      %p168 = pneg %p66
      %p169 = pneg %p97
      %p170 = pneg %p94
      %p171 = scmp.lt.s32.totalorder %s20, 2
      %s172 = scalar_select %p171, %s20, 2
      %p173 = scmp.lt.s32.totalorder %s19, 1
      %s174 = scalar_select %p173, %s19, 1
      %s175 = smul.addr %s174, 16
      %s176 = smul.addr %s172, 32
      %s177 = sadd.s32 %s175, %s176
      %s178 = smul.addr %s177, 8
      %s179 = scalar_lea.vmem %s2, %s178
      %p180 = pneg %p123
      %p181 = pneg %p120
      %p182 = scmp.lt.s32.totalorder %s19, 1
      %s183 = scalar_select %p182, %s19, 1
      %s184 = smul.addr %s183, 16
      %s185 = smul.addr %s184, 8
      %s186 = scalar_lea.vmem %s3, %s185
      %p187 = scmp.lt.s32.totalorder %s19, 1
      %s188 = scalar_select %p187, %s19, 1
      %s189 = smul.addr %s188, 16
      %s190 = smul.addr %s189, 8
      %s191 = scalar_lea.vmem %s0, %s190
      %p192 = scmp.lt.s32.totalorder %s20, 2
      %s193 = scalar_select %p192, %s20, 2
      %p194 = scmp.lt.s32.totalorder %s19, 1
      %s195 = scalar_select %p194, %s19, 1
      %s196 = smul.addr %s195, 16
      %s197 = smul.addr %s193, 32
      %s198 = sadd.s32 %s196, %s197
      %s199 = smul.addr %s198, 8
      %s200 = scalar_lea.vmem %s2, %s199
      %p201 = scmp.lt.s32.totalorder %s19, 1
      %s202 = scalar_select %p201, %s19, 1
      %s203 = smul.addr %s202, 16
      %s204 = smul.addr %s203, 8
      %s205 = scalar_lea.vmem %s3, %s204
      %p206 = scmp.eq.s32.totalorder %s20, 0
      // Predicated region
      $region29: #{graph_learner_heads.1} parent=27 // pred_check
        %p207 = pneg %p206
      $region30: #{graph_learner_heads.1} parent=27 // pred_check_branch
        %209 = sbr.rel (%p207) target = $region32
      $region31: #{graph_learner_heads.1} parent=27 // pred_region
        %v210 = vld [vmem:[%s191] sm:$0xff]
        %v211 = vld [vmem:[%s191 + $0x8] sm:$0xff]
        %v212 = vld [vmem:[%s191 + $0x10] sm:$0xff]
        %v213 = vld [vmem:[%s191 + $0x18] sm:$0xff]
        %v214 = vld [vmem:[%s191 + $0x20] sm:$0xff]
        %v215 = vld [vmem:[%s191 + $0x28] sm:$0xff]
        %v216 = vld [vmem:[%s191 + $0x30] sm:$0xff]
        %v217 = vld [vmem:[%s191 + $0x38] sm:$0xff]
        %v218 = vld [vmem:[%s191 + $0x40] sm:$0xff]
        %v219 = vld [vmem:[%s191 + $0x48] sm:$0xff]
        %v220 = vld [vmem:[%s191 + $0x50] sm:$0xff]
        %v221 = vld [vmem:[%s191 + $0x58] sm:$0xff]
        %v222 = vld [vmem:[%s191 + $0x60] sm:$0xff]
        %v223 = vld [vmem:[%s191 + $0x68] sm:$0xff]
        %v224 = vld [vmem:[%s191 + $0x70] sm:$0xff]
        %v225 = vld [vmem:[%s191 + $0x78] sm:$0xff]
        %v226 = vld [vmem:[%s1] sm:$0xff]
        %v227 = vld [vmem:[%s1 + $0x8] sm:$0xff]
        %v228 = vld [vmem:[%s1 + $0x10] sm:$0xff]
        %v229 = vld [vmem:[%s1 + $0x18] sm:$0xff]
        %v230 = vld [vmem:[%s1 + $0x20] sm:$0xff]
        %v231 = vld [vmem:[%s1 + $0x28] sm:$0xff]
        %vm232 = vcmask 130048
        %v234 = vsel %vm232, %v210, 0
        %v237 = vsel %vm232, %v211, 0
        %v240 = vsel %vm232, %v212, 0
        %v243 = vsel %vm232, %v213, 0
        %v246 = vsel %vm232, %v214, 0
        %v249 = vsel %vm232, %v215, 0
        %v252 = vsel %vm232, %v216, 0
        %v255 = vsel %vm232, %v217, 0
        %v258 = vsel %vm232, %v218, 0
        %v261 = vsel %vm232, %v219, 0
        %v264 = vsel %vm232, %v220, 0
        %v267 = vsel %vm232, %v221, 0
        %v270 = vsel %vm232, %v222, 0
        %v273 = vsel %vm232, %v223, 0
        %v276 = vsel %vm232, %v224, 0
        %v279 = vsel %vm232, %v225, 0
        %281 = vmatpush.msra.mxu0 0.0
        %282 = vmatpush.msra.mxu0 0.0
        %283 = vmatpush.msra.mxu0 0.0
        %284 = vmatpush.msra.mxu0 0.0
        %285 = vmatpush.msra.mxu0 0.0
        %286 = vmatpush.msra.mxu0 0.0
        %287 = vmatpush.msra.mxu0 0.0
        %288 = vmatpush.msra.mxu0 0.0
        %289 = vmatpush.msra.mxu0 0.0
        %290 = vmatpush.msra.mxu0 0.0
        %291 = vmatpush.msra.mxu0 0.0
        %292 = vmatpush.msra.mxu0 0.0
        %293 = vmatpush.msra.mxu0 0.0
        %294 = vmatpush.msra.mxu0 0.0
        %295 = vmatpush.msra.mxu0 %v229
        %296 = vmatpush.msra.mxu0 %v226
        %297 = vmatmul.f32.gmra.mxu0 %v234
        %v298 = vpop.f32.mrf.mxu0
        %v299 = vadd.f32 0.0, %v298
        %300 = vmatmul.f32.gmra.mxu0 %v237
        %v301 = vpop.f32.mrf.mxu0
        %v302 = vadd.f32 0.0, %v301
        %303 = vmatmul.f32.gmra.mxu0 %v240
        %v304 = vpop.f32.mrf.mxu0
        %v305 = vadd.f32 0.0, %v304
        %306 = vmatmul.f32.gmra.mxu0 %v243
        %v307 = vpop.f32.mrf.mxu0
        %v308 = vadd.f32 0.0, %v307
        %309 = vmatmul.f32.gmra.mxu0 %v246
        %v310 = vpop.f32.mrf.mxu0
        %v311 = vadd.f32 0.0, %v310
        %312 = vmatmul.f32.gmra.mxu0 %v249
        %v313 = vpop.f32.mrf.mxu0
        %v314 = vadd.f32 0.0, %v313
        %315 = vmatmul.f32.gmra.mxu0 %v252
        %v316 = vpop.f32.mrf.mxu0
        %v317 = vadd.f32 0.0, %v316
        %318 = vmatmul.f32.gmra.mxu0 %v255
        %v319 = vpop.f32.mrf.mxu0
        %v320 = vadd.f32 0.0, %v319
        %321 = vmatmul.f32.gmra.mxu0 %v258
        %v322 = vpop.f32.mrf.mxu0
        %v323 = vadd.f32 0.0, %v322
        %324 = vmatmul.f32.gmra.mxu0 %v261
        %v325 = vpop.f32.mrf.mxu0
        %v326 = vadd.f32 0.0, %v325
        %327 = vmatmul.f32.gmra.mxu0 %v264
        %v328 = vpop.f32.mrf.mxu0
        %v329 = vadd.f32 0.0, %v328
        %330 = vmatmul.f32.gmra.mxu0 %v267
        %v331 = vpop.f32.mrf.mxu0
        %v332 = vadd.f32 0.0, %v331
        %333 = vmatmul.f32.gmra.mxu0 %v270
        %v334 = vpop.f32.mrf.mxu0
        %v335 = vadd.f32 0.0, %v334
        %336 = vmatmul.f32.gmra.mxu0 %v273
        %v337 = vpop.f32.mrf.mxu0
        %v338 = vadd.f32 0.0, %v337
        %339 = vmatmul.f32.gmra.mxu0 %v276
        %v340 = vpop.f32.mrf.mxu0
        %v341 = vadd.f32 0.0, %v340
        %342 = vmatmul.f32.gmra.mxu0 %v279
        %v343 = vpop.f32.mrf.mxu0
        %v344 = vadd.f32 0.0, %v343
        %345 = vdwg.mxu0
        %346 = vmatpush.msra.mxu0 0.0
        %347 = vmatpush.msra.mxu0 0.0
        %348 = vmatpush.msra.mxu0 0.0
        %349 = vmatpush.msra.mxu0 0.0
        %350 = vmatpush.msra.mxu0 0.0
        %351 = vmatpush.msra.mxu0 0.0
        %352 = vmatpush.msra.mxu0 0.0
        %353 = vmatpush.msra.mxu0 0.0
        %354 = vmatpush.msra.mxu0 0.0
        %355 = vmatpush.msra.mxu0 0.0
        %356 = vmatpush.msra.mxu0 0.0
        %357 = vmatpush.msra.mxu0 0.0
        %358 = vmatpush.msra.mxu0 0.0
        %359 = vmatpush.msra.mxu0 0.0
        %360 = vmatpush.msra.mxu0 %v230
        %361 = vmatpush.msra.mxu0 %v227
        %362 = vmatmul.f32.gmra.mxu0 %v234
        %v363 = vpop.f32.mrf.mxu0
        %v364 = vadd.f32 0.0, %v363
        %365 = vmatmul.f32.gmra.mxu0 %v237
        %v366 = vpop.f32.mrf.mxu0
        %v367 = vadd.f32 0.0, %v366
        %368 = vmatmul.f32.gmra.mxu0 %v240
        %v369 = vpop.f32.mrf.mxu0
        %v370 = vadd.f32 0.0, %v369
        %371 = vmatmul.f32.gmra.mxu0 %v243
        %v372 = vpop.f32.mrf.mxu0
        %v373 = vadd.f32 0.0, %v372
        %374 = vmatmul.f32.gmra.mxu0 %v246
        %v375 = vpop.f32.mrf.mxu0
        %v376 = vadd.f32 0.0, %v375
        %377 = vmatmul.f32.gmra.mxu0 %v249
        %v378 = vpop.f32.mrf.mxu0
        %v379 = vadd.f32 0.0, %v378
        %380 = vmatmul.f32.gmra.mxu0 %v252
        %v381 = vpop.f32.mrf.mxu0
        %v382 = vadd.f32 0.0, %v381
        %383 = vmatmul.f32.gmra.mxu0 %v255
        %v384 = vpop.f32.mrf.mxu0
        %v385 = vadd.f32 0.0, %v384
        %386 = vmatmul.f32.gmra.mxu0 %v258
        %v387 = vpop.f32.mrf.mxu0
        %v388 = vadd.f32 0.0, %v387
        %389 = vmatmul.f32.gmra.mxu0 %v261
        %v390 = vpop.f32.mrf.mxu0
        %v391 = vadd.f32 0.0, %v390
        %392 = vmatmul.f32.gmra.mxu0 %v264
        %v393 = vpop.f32.mrf.mxu0
        %v394 = vadd.f32 0.0, %v393
        %395 = vmatmul.f32.gmra.mxu0 %v267
        %v396 = vpop.f32.mrf.mxu0
        %v397 = vadd.f32 0.0, %v396
        %398 = vmatmul.f32.gmra.mxu0 %v270
        %v399 = vpop.f32.mrf.mxu0
        %v400 = vadd.f32 0.0, %v399
        %401 = vmatmul.f32.gmra.mxu0 %v273
        %v402 = vpop.f32.mrf.mxu0
        %v403 = vadd.f32 0.0, %v402
        %404 = vmatmul.f32.gmra.mxu0 %v276
        %v405 = vpop.f32.mrf.mxu0
        %v406 = vadd.f32 0.0, %v405
        %407 = vmatmul.f32.gmra.mxu0 %v279
        %v408 = vpop.f32.mrf.mxu0
        %v409 = vadd.f32 0.0, %v408
        %410 = vdwg.mxu0
        %411 = vmatpush.msra.mxu0 0.0
        %412 = vmatpush.msra.mxu0 0.0
        %413 = vmatpush.msra.mxu0 0.0
        %414 = vmatpush.msra.mxu0 0.0
        %415 = vmatpush.msra.mxu0 0.0
        %416 = vmatpush.msra.mxu0 0.0
        %417 = vmatpush.msra.mxu0 0.0
        %418 = vmatpush.msra.mxu0 0.0
        %419 = vmatpush.msra.mxu0 0.0
        %420 = vmatpush.msra.mxu0 0.0
        %421 = vmatpush.msra.mxu0 0.0
        %422 = vmatpush.msra.mxu0 0.0
        %423 = vmatpush.msra.mxu0 0.0
        %424 = vmatpush.msra.mxu0 0.0
        %425 = vmatpush.msra.mxu0 %v231
        %426 = vmatpush.msra.mxu0 %v228
        %427 = vmatmul.f32.gmra.mxu0 %v234
        %v428 = vpop.f32.mrf.mxu0
        %v429 = vadd.f32 0.0, %v428
        %430 = vmatmul.f32.gmra.mxu0 %v237
        %v431 = vpop.f32.mrf.mxu0
        %v432 = vadd.f32 0.0, %v431
        %433 = vmatmul.f32.gmra.mxu0 %v240
        %v434 = vpop.f32.mrf.mxu0
        %v435 = vadd.f32 0.0, %v434
        %436 = vmatmul.f32.gmra.mxu0 %v243
        %v437 = vpop.f32.mrf.mxu0
        %v438 = vadd.f32 0.0, %v437
        %439 = vmatmul.f32.gmra.mxu0 %v246
        %v440 = vpop.f32.mrf.mxu0
        %v441 = vadd.f32 0.0, %v440
        %442 = vmatmul.f32.gmra.mxu0 %v249
        %v443 = vpop.f32.mrf.mxu0
        %v444 = vadd.f32 0.0, %v443
        %445 = vmatmul.f32.gmra.mxu0 %v252
        %v446 = vpop.f32.mrf.mxu0
        %v447 = vadd.f32 0.0, %v446
        %448 = vmatmul.f32.gmra.mxu0 %v255
        %v449 = vpop.f32.mrf.mxu0
        %v450 = vadd.f32 0.0, %v449
        %451 = vmatmul.f32.gmra.mxu0 %v258
        %v452 = vpop.f32.mrf.mxu0
        %v453 = vadd.f32 0.0, %v452
        %454 = vmatmul.f32.gmra.mxu0 %v261
        %v455 = vpop.f32.mrf.mxu0
        %v456 = vadd.f32 0.0, %v455
        %457 = vmatmul.f32.gmra.mxu0 %v264
        %v458 = vpop.f32.mrf.mxu0
        %v459 = vadd.f32 0.0, %v458
        %460 = vmatmul.f32.gmra.mxu0 %v267
        %v461 = vpop.f32.mrf.mxu0
        %v462 = vadd.f32 0.0, %v461
        %463 = vmatmul.f32.gmra.mxu0 %v270
        %v464 = vpop.f32.mrf.mxu0
        %v465 = vadd.f32 0.0, %v464
        %466 = vmatmul.f32.gmra.mxu0 %v273
        %v467 = vpop.f32.mrf.mxu0
        %v468 = vadd.f32 0.0, %v467
        %469 = vmatmul.f32.gmra.mxu0 %v276
        %v470 = vpop.f32.mrf.mxu0
        %v471 = vadd.f32 0.0, %v470
        %472 = vmatmul.f32.gmra.mxu0 %v279
        %v473 = vpop.f32.mrf.mxu0
        %v474 = vadd.f32 0.0, %v473
        %475 = vdwg.mxu0
        %vm476 = vcmp.gt.f32.partialorder %v299, 0.0
        %vm477 = vcmp.gt.f32.partialorder %v364, 0.0
        %vm478 = vcmp.gt.f32.partialorder %v429, 0.0
        %vm479 = vcmp.gt.f32.partialorder %v302, 0.0
        %vm480 = vcmp.gt.f32.partialorder %v367, 0.0
        %vm481 = vcmp.gt.f32.partialorder %v432, 0.0
        %vm482 = vcmp.gt.f32.partialorder %v305, 0.0
        %vm483 = vcmp.gt.f32.partialorder %v370, 0.0
        %vm484 = vcmp.gt.f32.partialorder %v435, 0.0
        %vm485 = vcmp.gt.f32.partialorder %v308, 0.0
        %vm486 = vcmp.gt.f32.partialorder %v373, 0.0
        %vm487 = vcmp.gt.f32.partialorder %v438, 0.0
        %vm488 = vcmp.gt.f32.partialorder %v311, 0.0
        %vm489 = vcmp.gt.f32.partialorder %v376, 0.0
        %vm490 = vcmp.gt.f32.partialorder %v441, 0.0
        %vm491 = vcmp.gt.f32.partialorder %v314, 0.0
        %vm492 = vcmp.gt.f32.partialorder %v379, 0.0
        %vm493 = vcmp.gt.f32.partialorder %v444, 0.0
        %vm494 = vcmp.gt.f32.partialorder %v317, 0.0
        %vm495 = vcmp.gt.f32.partialorder %v382, 0.0
        %vm496 = vcmp.gt.f32.partialorder %v447, 0.0
        %vm497 = vcmp.gt.f32.partialorder %v320, 0.0
        %vm498 = vcmp.gt.f32.partialorder %v385, 0.0
        %vm499 = vcmp.gt.f32.partialorder %v450, 0.0
        %vm500 = vcmp.gt.f32.partialorder %v323, 0.0
        %vm501 = vcmp.gt.f32.partialorder %v388, 0.0
        %vm502 = vcmp.gt.f32.partialorder %v453, 0.0
        %vm503 = vcmp.gt.f32.partialorder %v326, 0.0
        %vm504 = vcmp.gt.f32.partialorder %v391, 0.0
        %vm505 = vcmp.gt.f32.partialorder %v456, 0.0
        %vm506 = vcmp.gt.f32.partialorder %v329, 0.0
        %vm507 = vcmp.gt.f32.partialorder %v394, 0.0
        %vm508 = vcmp.gt.f32.partialorder %v459, 0.0
        %vm509 = vcmp.gt.f32.partialorder %v332, 0.0
        %vm510 = vcmp.gt.f32.partialorder %v397, 0.0
        %vm511 = vcmp.gt.f32.partialorder %v462, 0.0
        %vm512 = vcmp.gt.f32.partialorder %v335, 0.0
        %vm513 = vcmp.gt.f32.partialorder %v400, 0.0
        %vm514 = vcmp.gt.f32.partialorder %v465, 0.0
        %vm515 = vcmp.gt.f32.partialorder %v338, 0.0
        %vm516 = vcmp.gt.f32.partialorder %v403, 0.0
        %vm517 = vcmp.gt.f32.partialorder %v468, 0.0
        %vm518 = vcmp.gt.f32.partialorder %v341, 0.0
        %vm519 = vcmp.gt.f32.partialorder %v406, 0.0
        %vm520 = vcmp.gt.f32.partialorder %v471, 0.0
        %vm521 = vcmp.gt.f32.partialorder %v344, 0.0
        %vm522 = vcmp.gt.f32.partialorder %v409, 0.0
        %vm523 = vcmp.gt.f32.partialorder %v474, 0.0
        %v524 = vmul.f32 %v299, 0.01
        %v525 = vmul.f32 %v364, 0.01
        %v526 = vmul.f32 %v429, 0.01
        %v527 = vmul.f32 %v302, 0.01
        %v528 = vmul.f32 %v367, 0.01
        %v529 = vmul.f32 %v432, 0.01
        %v530 = vmul.f32 %v305, 0.01
        %v531 = vmul.f32 %v370, 0.01
        %v532 = vmul.f32 %v435, 0.01
        %v533 = vmul.f32 %v308, 0.01
        %v534 = vmul.f32 %v373, 0.01
        %v535 = vmul.f32 %v438, 0.01
        %v536 = vmul.f32 %v311, 0.01
        %v537 = vmul.f32 %v376, 0.01
        %v538 = vmul.f32 %v441, 0.01
        %v539 = vmul.f32 %v314, 0.01
        %v540 = vmul.f32 %v379, 0.01
        %v541 = vmul.f32 %v444, 0.01
        %v542 = vmul.f32 %v317, 0.01
        %v543 = vmul.f32 %v382, 0.01
        %v544 = vmul.f32 %v447, 0.01
        %v545 = vmul.f32 %v320, 0.01
        %v546 = vmul.f32 %v385, 0.01
        %v547 = vmul.f32 %v450, 0.01
        %v548 = vmul.f32 %v323, 0.01
        %v549 = vmul.f32 %v388, 0.01
        %v550 = vmul.f32 %v453, 0.01
        %v551 = vmul.f32 %v326, 0.01
        %v552 = vmul.f32 %v391, 0.01
        %v553 = vmul.f32 %v456, 0.01
        %v554 = vmul.f32 %v329, 0.01
        %v555 = vmul.f32 %v394, 0.01
        %v556 = vmul.f32 %v459, 0.01
        %v557 = vmul.f32 %v332, 0.01
        %v558 = vmul.f32 %v397, 0.01
        %v559 = vmul.f32 %v462, 0.01
        %v560 = vmul.f32 %v335, 0.01
        %v561 = vmul.f32 %v400, 0.01
        %v562 = vmul.f32 %v465, 0.01
        %v563 = vmul.f32 %v338, 0.01
        %v564 = vmul.f32 %v403, 0.01
        %v565 = vmul.f32 %v468, 0.01
        %v566 = vmul.f32 %v341, 0.01
        %v567 = vmul.f32 %v406, 0.01
        %v568 = vmul.f32 %v471, 0.01
        %v569 = vmul.f32 %v344, 0.01
        %v570 = vmul.f32 %v409, 0.01
        %v571 = vmul.f32 %v474, 0.01
        %v572 = vsel %vm476, %v299, %v524
        %v573 = vsel %vm477, %v364, %v525
        %v574 = vsel %vm478, %v429, %v526
        %v575 = vsel %vm479, %v302, %v527
        %v576 = vsel %vm480, %v367, %v528
        %v577 = vsel %vm481, %v432, %v529
        %v578 = vsel %vm482, %v305, %v530
        %v579 = vsel %vm483, %v370, %v531
        %v580 = vsel %vm484, %v435, %v532
        %v581 = vsel %vm485, %v308, %v533
        %v582 = vsel %vm486, %v373, %v534
        %v583 = vsel %vm487, %v438, %v535
        %v584 = vsel %vm488, %v311, %v536
        %v585 = vsel %vm489, %v376, %v537
        %v586 = vsel %vm490, %v441, %v538
        %v587 = vsel %vm491, %v314, %v539
        %v588 = vsel %vm492, %v379, %v540
        %v589 = vsel %vm493, %v444, %v541
        %v590 = vsel %vm494, %v317, %v542
        %v591 = vsel %vm495, %v382, %v543
        %v592 = vsel %vm496, %v447, %v544
        %v593 = vsel %vm497, %v320, %v545
        %v594 = vsel %vm498, %v385, %v546
        %v595 = vsel %vm499, %v450, %v547
        %v596 = vsel %vm500, %v323, %v548
        %v597 = vsel %vm501, %v388, %v549
        %v598 = vsel %vm502, %v453, %v550
        %v599 = vsel %vm503, %v326, %v551
        %v600 = vsel %vm504, %v391, %v552
        %v601 = vsel %vm505, %v456, %v553
        %v602 = vsel %vm506, %v329, %v554
        %v603 = vsel %vm507, %v394, %v555
        %v604 = vsel %vm508, %v459, %v556
        %v605 = vsel %vm509, %v332, %v557
        %v606 = vsel %vm510, %v397, %v558
        %v607 = vsel %vm511, %v462, %v559
        %v608 = vsel %vm512, %v335, %v560
        %v609 = vsel %vm513, %v400, %v561
        %v610 = vsel %vm514, %v465, %v562
        %v611 = vsel %vm515, %v338, %v563
        %v612 = vsel %vm516, %v403, %v564
        %v613 = vsel %vm517, %v468, %v565
        %v614 = vsel %vm518, %v341, %v566
        %v615 = vsel %vm519, %v406, %v567
        %v616 = vsel %vm520, %v471, %v568
        %v617 = vsel %vm521, %v344, %v569
        %v618 = vsel %vm522, %v409, %v570
        %v619 = vsel %vm523, %v474, %v571
        %620 = vst [vmem:[#allocation2] sm:$0xff] %v572
        %621 = vst [vmem:[#allocation2 + $0x8] sm:$0xff] %v575
        %622 = vst [vmem:[#allocation2 + $0x10] sm:$0xff] %v578
        %623 = vst [vmem:[#allocation2 + $0x18] sm:$0xff] %v581
        %624 = vst [vmem:[#allocation2 + $0x20] sm:$0xff] %v584
        %625 = vst [vmem:[#allocation2 + $0x28] sm:$0xff] %v587
        %626 = vst [vmem:[#allocation2 + $0x30] sm:$0xff] %v590
        %627 = vst [vmem:[#allocation2 + $0x38] sm:$0xff] %v593
        %628 = vst [vmem:[#allocation2 + $0x40] sm:$0xff] %v596
        %629 = vst [vmem:[#allocation2 + $0x48] sm:$0xff] %v599
        %630 = vst [vmem:[#allocation2 + $0x50] sm:$0xff] %v602
        %631 = vst [vmem:[#allocation2 + $0x58] sm:$0xff] %v605
        %632 = vst [vmem:[#allocation2 + $0x60] sm:$0xff] %v608
        %633 = vst [vmem:[#allocation2 + $0x68] sm:$0xff] %v611
        %634 = vst [vmem:[#allocation2 + $0x70] sm:$0xff] %v614
        %635 = vst [vmem:[#allocation2 + $0x78] sm:$0xff] %v617
        %636 = vxpose.xlu0.b32.start [1/16] %v572, 128
        %637 = vxpose.xlu0.b32.cont [2/16] %v575, 128
        %638 = vxpose.xlu0.b32.cont [3/16] %v578, 128
        %639 = vxpose.xlu0.b32.cont [4/16] %v581, 128
        %640 = vxpose.xlu0.b32.cont [5/16] %v584, 128
        %641 = vxpose.xlu0.b32.cont [6/16] %v587, 128
        %642 = vxpose.xlu0.b32.cont [7/16] %v590, 128
        %643 = vxpose.xlu0.b32.cont [8/16] %v593, 128
        %644 = vxpose.xlu0.b32.cont [9/16] %v596, 128
        %645 = vxpose.xlu0.b32.cont [10/16] %v599, 128
        %646 = vxpose.xlu0.b32.cont [11/16] %v602, 128
        %647 = vxpose.xlu0.b32.cont [12/16] %v605, 128
        %648 = vxpose.xlu0.b32.cont [13/16] %v608, 128
        %649 = vxpose.xlu0.b32.cont [14/16] %v611, 128
        %650 = vxpose.xlu0.b32.cont [15/16] %v614, 128
        %651 = vxpose.xlu0.b32.end [16/16] %v617, 128
        %v652 = vpop.trf.xlu0
        %v653 = vpop.trf.xlu0
        %v654 = vpop.trf.xlu0
        %v655 = vpop.trf.xlu0
        %v656 = vpop.trf.xlu0
        %v657 = vpop.trf.xlu0
        %v658 = vpop.trf.xlu0
        %v659 = vpop.trf.xlu0
        %v660 = vpop.trf.xlu0
        %v661 = vpop.trf.xlu0
        %v662 = vpop.trf.xlu0
        %v663 = vpop.trf.xlu0
        %v664 = vpop.trf.xlu0
        %v665 = vpop.trf.xlu0
        %v666 = vpop.trf.xlu0
        %v667 = vpop.trf.xlu0
        %668 = vst [vmem:[#allocation3] sm:$0xff] %v652
        %669 = vst [vmem:[#allocation3 + $0x8] sm:$0xff] %v653
        %670 = vst [vmem:[#allocation3 + $0x10] sm:$0xff] %v654
        %671 = vst [vmem:[#allocation3 + $0x18] sm:$0xff] %v655
        %672 = vst [vmem:[#allocation3 + $0x20] sm:$0xff] %v656
        %673 = vst [vmem:[#allocation3 + $0x28] sm:$0xff] %v657
        %674 = vst [vmem:[#allocation3 + $0x30] sm:$0xff] %v658
        %675 = vst [vmem:[#allocation3 + $0x38] sm:$0xff] %v659
        %676 = vst [vmem:[#allocation3 + $0x40] sm:$0xff] %v660
        %677 = vst [vmem:[#allocation3 + $0x48] sm:$0xff] %v661
        %678 = vst [vmem:[#allocation3 + $0x50] sm:$0xff] %v662
        %679 = vst [vmem:[#allocation3 + $0x58] sm:$0xff] %v663
        %680 = vst [vmem:[#allocation3 + $0x60] sm:$0xff] %v664
        %681 = vst [vmem:[#allocation3 + $0x68] sm:$0xff] %v665
        %682 = vst [vmem:[#allocation3 + $0x70] sm:$0xff] %v666
        %683 = vst [vmem:[#allocation3 + $0x78] sm:$0xff] %v667
        %s684 = scalar_lea.vmem [#allocation2], 128
        %685 = vst [vmem:[%s684] sm:$0xff] %v573
        %686 = vst [vmem:[%s684 + $0x8] sm:$0xff] %v576
        %687 = vst [vmem:[%s684 + $0x10] sm:$0xff] %v579
        %688 = vst [vmem:[%s684 + $0x18] sm:$0xff] %v582
        %689 = vst [vmem:[%s684 + $0x20] sm:$0xff] %v585
        %690 = vst [vmem:[%s684 + $0x28] sm:$0xff] %v588
        %691 = vst [vmem:[%s684 + $0x30] sm:$0xff] %v591
        %692 = vst [vmem:[%s684 + $0x38] sm:$0xff] %v594
        %693 = vst [vmem:[%s684 + $0x40] sm:$0xff] %v597
        %694 = vst [vmem:[%s684 + $0x48] sm:$0xff] %v600
        %695 = vst [vmem:[%s684 + $0x50] sm:$0xff] %v603
        %696 = vst [vmem:[%s684 + $0x58] sm:$0xff] %v606
        %697 = vst [vmem:[%s684 + $0x60] sm:$0xff] %v609
        %698 = vst [vmem:[%s684 + $0x68] sm:$0xff] %v612
        %699 = vst [vmem:[%s684 + $0x70] sm:$0xff] %v615
        %700 = vst [vmem:[%s684 + $0x78] sm:$0xff] %v618
        %701 = vxpose.xlu0.b32.start [1/16] %v573, 128
        %702 = vxpose.xlu0.b32.cont [2/16] %v576, 128
        %703 = vxpose.xlu0.b32.cont [3/16] %v579, 128
        %704 = vxpose.xlu0.b32.cont [4/16] %v582, 128
        %705 = vxpose.xlu0.b32.cont [5/16] %v585, 128
        %706 = vxpose.xlu0.b32.cont [6/16] %v588, 128
        %707 = vxpose.xlu0.b32.cont [7/16] %v591, 128
        %708 = vxpose.xlu0.b32.cont [8/16] %v594, 128
        %709 = vxpose.xlu0.b32.cont [9/16] %v597, 128
        %710 = vxpose.xlu0.b32.cont [10/16] %v600, 128
        %711 = vxpose.xlu0.b32.cont [11/16] %v603, 128
        %712 = vxpose.xlu0.b32.cont [12/16] %v606, 128
        %713 = vxpose.xlu0.b32.cont [13/16] %v609, 128
        %714 = vxpose.xlu0.b32.cont [14/16] %v612, 128
        %715 = vxpose.xlu0.b32.cont [15/16] %v615, 128
        %716 = vxpose.xlu0.b32.end [16/16] %v618, 128
        %v717 = vpop.trf.xlu0
        %v718 = vpop.trf.xlu0
        %v719 = vpop.trf.xlu0
        %v720 = vpop.trf.xlu0
        %v721 = vpop.trf.xlu0
        %v722 = vpop.trf.xlu0
        %v723 = vpop.trf.xlu0
        %v724 = vpop.trf.xlu0
        %v725 = vpop.trf.xlu0
        %v726 = vpop.trf.xlu0
        %v727 = vpop.trf.xlu0
        %v728 = vpop.trf.xlu0
        %v729 = vpop.trf.xlu0
        %v730 = vpop.trf.xlu0
        %v731 = vpop.trf.xlu0
        %v732 = vpop.trf.xlu0
        %s733 = scalar_lea.vmem [#allocation3], 128
        %734 = vst [vmem:[%s733] sm:$0xff] %v717
        %735 = vst [vmem:[%s733 + $0x8] sm:$0xff] %v718
        %736 = vst [vmem:[%s733 + $0x10] sm:$0xff] %v719
        %737 = vst [vmem:[%s733 + $0x18] sm:$0xff] %v720
        %738 = vst [vmem:[%s733 + $0x20] sm:$0xff] %v721
        %739 = vst [vmem:[%s733 + $0x28] sm:$0xff] %v722
        %740 = vst [vmem:[%s733 + $0x30] sm:$0xff] %v723
        %741 = vst [vmem:[%s733 + $0x38] sm:$0xff] %v724
        %742 = vst [vmem:[%s733 + $0x40] sm:$0xff] %v725
        %743 = vst [vmem:[%s733 + $0x48] sm:$0xff] %v726
        %744 = vst [vmem:[%s733 + $0x50] sm:$0xff] %v727
        %745 = vst [vmem:[%s733 + $0x58] sm:$0xff] %v728
        %746 = vst [vmem:[%s733 + $0x60] sm:$0xff] %v729
        %747 = vst [vmem:[%s733 + $0x68] sm:$0xff] %v730
        %748 = vst [vmem:[%s733 + $0x70] sm:$0xff] %v731
        %749 = vst [vmem:[%s733 + $0x78] sm:$0xff] %v732
        %s750 = scalar_lea.vmem [#allocation2], 256
        %751 = vst [vmem:[%s750] sm:$0xff] %v574
        %752 = vst [vmem:[%s750 + $0x8] sm:$0xff] %v577
        %753 = vst [vmem:[%s750 + $0x10] sm:$0xff] %v580
        %754 = vst [vmem:[%s750 + $0x18] sm:$0xff] %v583
        %755 = vst [vmem:[%s750 + $0x20] sm:$0xff] %v586
        %756 = vst [vmem:[%s750 + $0x28] sm:$0xff] %v589
        %757 = vst [vmem:[%s750 + $0x30] sm:$0xff] %v592
        %758 = vst [vmem:[%s750 + $0x38] sm:$0xff] %v595
        %759 = vst [vmem:[%s750 + $0x40] sm:$0xff] %v598
        %760 = vst [vmem:[%s750 + $0x48] sm:$0xff] %v601
        %761 = vst [vmem:[%s750 + $0x50] sm:$0xff] %v604
        %762 = vst [vmem:[%s750 + $0x58] sm:$0xff] %v607
        %763 = vst [vmem:[%s750 + $0x60] sm:$0xff] %v610
        %764 = vst [vmem:[%s750 + $0x68] sm:$0xff] %v613
        %765 = vst [vmem:[%s750 + $0x70] sm:$0xff] %v616
        %766 = vst [vmem:[%s750 + $0x78] sm:$0xff] %v619
        %767 = vxpose.xlu0.b32.start [1/16] %v574, 128
        %768 = vxpose.xlu0.b32.cont [2/16] %v577, 128
        %769 = vxpose.xlu0.b32.cont [3/16] %v580, 128
        %770 = vxpose.xlu0.b32.cont [4/16] %v583, 128
        %771 = vxpose.xlu0.b32.cont [5/16] %v586, 128
        %772 = vxpose.xlu0.b32.cont [6/16] %v589, 128
        %773 = vxpose.xlu0.b32.cont [7/16] %v592, 128
        %774 = vxpose.xlu0.b32.cont [8/16] %v595, 128
        %775 = vxpose.xlu0.b32.cont [9/16] %v598, 128
        %776 = vxpose.xlu0.b32.cont [10/16] %v601, 128
        %777 = vxpose.xlu0.b32.cont [11/16] %v604, 128
        %778 = vxpose.xlu0.b32.cont [12/16] %v607, 128
        %779 = vxpose.xlu0.b32.cont [13/16] %v610, 128
        %780 = vxpose.xlu0.b32.cont [14/16] %v613, 128
        %781 = vxpose.xlu0.b32.cont [15/16] %v616, 128
        %782 = vxpose.xlu0.b32.end [16/16] %v619, 128
        %v783 = vpop.trf.xlu0
        %v784 = vpop.trf.xlu0
        %v785 = vpop.trf.xlu0
        %v786 = vpop.trf.xlu0
        %v787 = vpop.trf.xlu0
        %v788 = vpop.trf.xlu0
        %v789 = vpop.trf.xlu0
        %v790 = vpop.trf.xlu0
        %v791 = vpop.trf.xlu0
        %v792 = vpop.trf.xlu0
        %v793 = vpop.trf.xlu0
        %v794 = vpop.trf.xlu0
        %v795 = vpop.trf.xlu0
        %v796 = vpop.trf.xlu0
        %v797 = vpop.trf.xlu0
        %v798 = vpop.trf.xlu0
        %s799 = scalar_lea.vmem [#allocation3], 256
        %800 = vst [vmem:[%s799] sm:$0xff] %v783
        %801 = vst [vmem:[%s799 + $0x8] sm:$0xff] %v784
        %802 = vst [vmem:[%s799 + $0x10] sm:$0xff] %v785
        %803 = vst [vmem:[%s799 + $0x18] sm:$0xff] %v786
        %804 = vst [vmem:[%s799 + $0x20] sm:$0xff] %v787
        %805 = vst [vmem:[%s799 + $0x28] sm:$0xff] %v788
        %806 = vst [vmem:[%s799 + $0x30] sm:$0xff] %v789
        %807 = vst [vmem:[%s799 + $0x38] sm:$0xff] %v790
        %808 = vst [vmem:[%s799 + $0x40] sm:$0xff] %v791
        %809 = vst [vmem:[%s799 + $0x48] sm:$0xff] %v792
        %810 = vst [vmem:[%s799 + $0x50] sm:$0xff] %v793
        %811 = vst [vmem:[%s799 + $0x58] sm:$0xff] %v794
        %812 = vst [vmem:[%s799 + $0x60] sm:$0xff] %v795
        %813 = vst [vmem:[%s799 + $0x68] sm:$0xff] %v796
        %814 = vst [vmem:[%s799 + $0x70] sm:$0xff] %v797
        %815 = vst [vmem:[%s799 + $0x78] sm:$0xff] %v798
        %816 = vst [vmem:[%s205] sm:$0xff] 0.0
        %817 = vst [vmem:[%s205 + $0x8] sm:$0xff] 0.0
        %818 = vst [vmem:[%s205 + $0x10] sm:$0xff] 0.0
        %819 = vst [vmem:[%s205 + $0x18] sm:$0xff] 0.0
        %820 = vst [vmem:[%s205 + $0x20] sm:$0xff] 0.0
        %821 = vst [vmem:[%s205 + $0x28] sm:$0xff] 0.0
        %822 = vst [vmem:[%s205 + $0x30] sm:$0xff] 0.0
        %823 = vst [vmem:[%s205 + $0x38] sm:$0xff] 0.0
        %824 = vst [vmem:[%s205 + $0x40] sm:$0xff] 0.0
        %825 = vst [vmem:[%s205 + $0x48] sm:$0xff] 0.0
        %826 = vst [vmem:[%s205 + $0x50] sm:$0xff] 0.0
        %827 = vst [vmem:[%s205 + $0x58] sm:$0xff] 0.0
        %828 = vst [vmem:[%s205 + $0x60] sm:$0xff] 0.0
        %829 = vst [vmem:[%s205 + $0x68] sm:$0xff] 0.0
        %830 = vst [vmem:[%s205 + $0x70] sm:$0xff] 0.0
        %831 = vst [vmem:[%s205 + $0x78] sm:$0xff] 0.0
      $region32: #{graph_learner_heads.1} parent=27 // pred_fallthru
        _
      %s832 = smul.u32 %s20, 128
      %s833 = scalar_lea.vmem [#allocation2], %s832
      %v834 = vld [vmem:[%s833] sm:$0xff]
      %v835 = vld [vmem:[%s833 + $0x8] sm:$0xff]
      %v836 = vld [vmem:[%s833 + $0x10] sm:$0xff]
      %v837 = vld [vmem:[%s833 + $0x18] sm:$0xff]
      %v838 = vld [vmem:[%s833 + $0x20] sm:$0xff]
      %v839 = vld [vmem:[%s833 + $0x28] sm:$0xff]
      %v840 = vld [vmem:[%s833 + $0x30] sm:$0xff]
      %v841 = vld [vmem:[%s833 + $0x38] sm:$0xff]
      %v842 = vld [vmem:[%s833 + $0x40] sm:$0xff]
      %v843 = vld [vmem:[%s833 + $0x48] sm:$0xff]
      %v844 = vld [vmem:[%s833 + $0x50] sm:$0xff]
      %v845 = vld [vmem:[%s833 + $0x58] sm:$0xff]
      %v846 = vld [vmem:[%s833 + $0x60] sm:$0xff]
      %v847 = vld [vmem:[%s833 + $0x68] sm:$0xff]
      %v848 = vld [vmem:[%s833 + $0x70] sm:$0xff]
      %v849 = vld [vmem:[%s833 + $0x78] sm:$0xff]
      %s850 = scalar_lea.vmem [#allocation3], %s832
      %v851 = vld [vmem:[%s850] sm:$0xff]
      %v852 = vld [vmem:[%s850 + $0x8] sm:$0xff]
      %v853 = vld [vmem:[%s850 + $0x10] sm:$0xff]
      %v854 = vld [vmem:[%s850 + $0x18] sm:$0xff]
      %v855 = vld [vmem:[%s850 + $0x20] sm:$0xff]
      %v856 = vld [vmem:[%s850 + $0x28] sm:$0xff]
      %v857 = vld [vmem:[%s850 + $0x30] sm:$0xff]
      %v858 = vld [vmem:[%s850 + $0x38] sm:$0xff]
      %v859 = vld [vmem:[%s850 + $0x40] sm:$0xff]
      %v860 = vld [vmem:[%s850 + $0x48] sm:$0xff]
      %v861 = vld [vmem:[%s850 + $0x50] sm:$0xff]
      %v862 = vld [vmem:[%s850 + $0x58] sm:$0xff]
      %v863 = vld [vmem:[%s850 + $0x60] sm:$0xff]
      %v864 = vld [vmem:[%s850 + $0x68] sm:$0xff]
      %v865 = vld [vmem:[%s850 + $0x70] sm:$0xff]
      %v866 = vld [vmem:[%s850 + $0x78] sm:$0xff]
      %867 = vmatpush.msra.mxu0 %v866
      %868 = vmatpush.msra.mxu0 %v865
      %869 = vmatpush.msra.mxu0 %v864
      %870 = vmatpush.msra.mxu0 %v863
      %871 = vmatpush.msra.mxu0 %v862
      %872 = vmatpush.msra.mxu0 %v861
      %873 = vmatpush.msra.mxu0 %v860
      %874 = vmatpush.msra.mxu0 %v859
      %875 = vmatpush.msra.mxu0 %v858
      %876 = vmatpush.msra.mxu0 %v857
      %877 = vmatpush.msra.mxu0 %v856
      %878 = vmatpush.msra.mxu0 %v855
      %879 = vmatpush.msra.mxu0 %v854
      %880 = vmatpush.msra.mxu0 %v853
      %881 = vmatpush.msra.mxu0 %v852
      %882 = vmatpush.msra.mxu0 %v851
      %883 = vmatmul.f32.gmra.mxu0 %v834
      %v884 = vpop.f32.mrf.mxu0
      %v885 = vadd.f32 0.0, %v884
      %886 = vmatmul.f32.gmra.mxu0 %v835
      %v887 = vpop.f32.mrf.mxu0
      %v888 = vadd.f32 0.0, %v887
      %889 = vmatmul.f32.gmra.mxu0 %v836
      %v890 = vpop.f32.mrf.mxu0
      %v891 = vadd.f32 0.0, %v890
      %892 = vmatmul.f32.gmra.mxu0 %v837
      %v893 = vpop.f32.mrf.mxu0
      %v894 = vadd.f32 0.0, %v893
      %895 = vmatmul.f32.gmra.mxu0 %v838
      %v896 = vpop.f32.mrf.mxu0
      %v897 = vadd.f32 0.0, %v896
      %898 = vmatmul.f32.gmra.mxu0 %v839
      %v899 = vpop.f32.mrf.mxu0
      %v900 = vadd.f32 0.0, %v899
      %901 = vmatmul.f32.gmra.mxu0 %v840
      %v902 = vpop.f32.mrf.mxu0
      %v903 = vadd.f32 0.0, %v902
      %904 = vmatmul.f32.gmra.mxu0 %v841
      %v905 = vpop.f32.mrf.mxu0
      %v906 = vadd.f32 0.0, %v905
      %907 = vmatmul.f32.gmra.mxu0 %v842
      %v908 = vpop.f32.mrf.mxu0
      %v909 = vadd.f32 0.0, %v908
      %910 = vmatmul.f32.gmra.mxu0 %v843
      %v911 = vpop.f32.mrf.mxu0
      %v912 = vadd.f32 0.0, %v911
      %913 = vmatmul.f32.gmra.mxu0 %v844
      %v914 = vpop.f32.mrf.mxu0
      %v915 = vadd.f32 0.0, %v914
      %916 = vmatmul.f32.gmra.mxu0 %v845
      %v917 = vpop.f32.mrf.mxu0
      %v918 = vadd.f32 0.0, %v917
      %919 = vmatmul.f32.gmra.mxu0 %v846
      %v920 = vpop.f32.mrf.mxu0
      %v921 = vadd.f32 0.0, %v920
      %922 = vmatmul.f32.gmra.mxu0 %v847
      %v923 = vpop.f32.mrf.mxu0
      %v924 = vadd.f32 0.0, %v923
      %925 = vmatmul.f32.gmra.mxu0 %v848
      %v926 = vpop.f32.mrf.mxu0
      %v927 = vadd.f32 0.0, %v926
      %928 = vmatmul.f32.gmra.mxu0 %v849
      %v929 = vpop.f32.mrf.mxu0
      %v930 = vadd.f32 0.0, %v929
      %931 = vdwg.mxu0
      %v932 = vmul.f32 %v834, %v834
      %v933 = vmul.f32 %v835, %v835
      %v934 = vmul.f32 %v836, %v836
      %v935 = vmul.f32 %v837, %v837
      %v936 = vmul.f32 %v838, %v838
      %v937 = vmul.f32 %v839, %v839
      %v938 = vmul.f32 %v840, %v840
      %v939 = vmul.f32 %v841, %v841
      %v940 = vmul.f32 %v842, %v842
      %v941 = vmul.f32 %v843, %v843
      %v942 = vmul.f32 %v844, %v844
      %v943 = vmul.f32 %v845, %v845
      %v944 = vmul.f32 %v846, %v846
      %v945 = vmul.f32 %v847, %v847
      %v946 = vmul.f32 %v848, %v848
      %v947 = vmul.f32 %v849, %v849
      %948 = vadd.xlane.f32.xlu0 %v932
      %v949 = vpop.xlane.xlu0 %948
      %950 = vadd.xlane.f32.xlu0 %v933
      %v951 = vpop.xlane.xlu0 %950
      %952 = vadd.xlane.f32.xlu0 %v934
      %v953 = vpop.xlane.xlu0 %952
      %954 = vadd.xlane.f32.xlu0 %v935
      %v955 = vpop.xlane.xlu0 %954
      %956 = vadd.xlane.f32.xlu0 %v936
      %v957 = vpop.xlane.xlu0 %956
      %958 = vadd.xlane.f32.xlu0 %v937
      %v959 = vpop.xlane.xlu0 %958
      %960 = vadd.xlane.f32.xlu0 %v938
      %v961 = vpop.xlane.xlu0 %960
      %962 = vadd.xlane.f32.xlu0 %v939
      %v963 = vpop.xlane.xlu0 %962
      %964 = vadd.xlane.f32.xlu0 %v940
      %v965 = vpop.xlane.xlu0 %964
      %966 = vadd.xlane.f32.xlu0 %v941
      %v967 = vpop.xlane.xlu0 %966
      %968 = vadd.xlane.f32.xlu0 %v942
      %v969 = vpop.xlane.xlu0 %968
      %970 = vadd.xlane.f32.xlu0 %v943
      %v971 = vpop.xlane.xlu0 %970
      %972 = vadd.xlane.f32.xlu0 %v944
      %v973 = vpop.xlane.xlu0 %972
      %974 = vadd.xlane.f32.xlu0 %v945
      %v975 = vpop.xlane.xlu0 %974
      %976 = vadd.xlane.f32.xlu0 %v946
      %v977 = vpop.xlane.xlu0 %976
      %978 = vadd.xlane.f32.xlu0 %v947
      %v979 = vpop.xlane.xlu0 %978
      %v980 = vmul.f32 %v851, %v851
      %v981 = vmul.f32 %v852, %v852
      %v982 = vmul.f32 %v853, %v853
      %v983 = vmul.f32 %v854, %v854
      %v984 = vmul.f32 %v855, %v855
      %v985 = vmul.f32 %v856, %v856
      %v986 = vmul.f32 %v857, %v857
      %v987 = vmul.f32 %v858, %v858
      %v988 = vmul.f32 %v859, %v859
      %v989 = vmul.f32 %v860, %v860
      %v990 = vmul.f32 %v861, %v861
      %v991 = vmul.f32 %v862, %v862
      %v992 = vmul.f32 %v863, %v863
      %v993 = vmul.f32 %v864, %v864
      %v994 = vmul.f32 %v865, %v865
      %v995 = vmul.f32 %v866, %v866
      %v996 = vadd.f32 %v980, %v981
      %v997 = vadd.f32 %v996, %v982
      %v998 = vadd.f32 %v997, %v983
      %v999 = vadd.f32 %v998, %v984
      %v1000 = vadd.f32 %v999, %v985
      %v1001 = vadd.f32 %v1000, %v986
      %v1002 = vadd.f32 %v1001, %v987
      %v1003 = vadd.f32 %v1002, %v988
      %v1004 = vadd.f32 %v1003, %v989
      %v1005 = vadd.f32 %v1004, %v990
      %v1006 = vadd.f32 %v1005, %v991
      %v1007 = vadd.f32 %v1006, %v992
      %v1008 = vadd.f32 %v1007, %v993
      %v1009 = vadd.f32 %v1008, %v994
      %v1010 = vadd.f32 %v1009, %v995
      %v1011 = vrot.slane %v1010, 4
      %v1012 = vadd.f32 %v1010, %v1011
      %v1013 = vrot.slane %v1012, 2
      %v1014 = vadd.f32 %v1012, %v1013
      %v1015 = vrot.slane %v1014, 1
      %v1016 = vadd.f32 %v1014, %v1015
      %v1017 = vmul.f32 %v949, %v1016
      %v1018 = vmul.f32 %v951, %v1016
      %v1019 = vmul.f32 %v953, %v1016
      %v1020 = vmul.f32 %v955, %v1016
      %v1021 = vmul.f32 %v957, %v1016
      %v1022 = vmul.f32 %v959, %v1016
      %v1023 = vmul.f32 %v961, %v1016
      %v1024 = vmul.f32 %v963, %v1016
      %v1025 = vmul.f32 %v965, %v1016
      %v1026 = vmul.f32 %v967, %v1016
      %v1027 = vmul.f32 %v969, %v1016
      %v1028 = vmul.f32 %v971, %v1016
      %v1029 = vmul.f32 %v973, %v1016
      %v1030 = vmul.f32 %v975, %v1016
      %v1031 = vmul.f32 %v977, %v1016
      %v1032 = vmul.f32 %v979, %v1016
      %v1033 = vmax.f32 %v1017, 1e-06
      %v1034 = vmax.f32 %v1018, 1e-06
      %v1035 = vmax.f32 %v1019, 1e-06
      %v1036 = vmax.f32 %v1020, 1e-06
      %v1037 = vmax.f32 %v1021, 1e-06
      %v1038 = vmax.f32 %v1022, 1e-06
      %v1039 = vmax.f32 %v1023, 1e-06
      %v1040 = vmax.f32 %v1024, 1e-06
      %v1041 = vmax.f32 %v1025, 1e-06
      %v1042 = vmax.f32 %v1026, 1e-06
      %v1043 = vmax.f32 %v1027, 1e-06
      %v1044 = vmax.f32 %v1028, 1e-06
      %v1045 = vmax.f32 %v1029, 1e-06
      %v1046 = vmax.f32 %v1030, 1e-06
      %v1047 = vmax.f32 %v1031, 1e-06
      %v1048 = vmax.f32 %v1032, 1e-06
      %v1049 = vand.u32 2147483647, %v885
      %v1050 = vand.u32 2147483647, %v888
      %v1051 = vand.u32 2147483647, %v891
      %v1052 = vand.u32 2147483647, %v894
      %v1053 = vand.u32 2147483647, %v897
      %v1054 = vand.u32 2147483647, %v900
      %v1055 = vand.u32 2147483647, %v903
      %v1056 = vand.u32 2147483647, %v906
      %v1057 = vand.u32 2147483647, %v909
      %v1058 = vand.u32 2147483647, %v912
      %v1059 = vand.u32 2147483647, %v915
      %v1060 = vand.u32 2147483647, %v918
      %v1061 = vand.u32 2147483647, %v921
      %v1062 = vand.u32 2147483647, %v924
      %v1063 = vand.u32 2147483647, %v927
      %v1064 = vand.u32 2147483647, %v930
      %v1065 = vrsqrt.pop %v1033
      %v1066 = vmul.f32 %v1065, %v1033
      %v1067 = vmul.f32 %v1066, %v1065
      %v1068 = vmul.f32 0.5, %v1067
      %v1069 = vsub.f32 1.5, %v1068
      %v1070 = vmul.f32 %v1065, %v1069
      %vm1071 = vweird.f32 %v1033
      %vm1072 = vweird.f32 %v1065
      %vm1073 = vmor %vm1071, %vm1072
      %v1074 = vsel %vm1073, %v1065, %v1070
      %v1075 = vrsqrt.pop %v1034
      %v1076 = vmul.f32 %v1075, %v1034
      %v1077 = vmul.f32 %v1076, %v1075
      %v1078 = vmul.f32 0.5, %v1077
      %v1079 = vsub.f32 1.5, %v1078
      %v1080 = vmul.f32 %v1075, %v1079
      %vm1081 = vweird.f32 %v1034
      %vm1082 = vweird.f32 %v1075
      %vm1083 = vmor %vm1081, %vm1082
      %v1084 = vsel %vm1083, %v1075, %v1080
      %v1085 = vrsqrt.pop %v1035
      %v1086 = vmul.f32 %v1085, %v1035
      %v1087 = vmul.f32 %v1086, %v1085
      %v1088 = vmul.f32 0.5, %v1087
      %v1089 = vsub.f32 1.5, %v1088
      %v1090 = vmul.f32 %v1085, %v1089
      %vm1091 = vweird.f32 %v1035
      %vm1092 = vweird.f32 %v1085
      %vm1093 = vmor %vm1091, %vm1092
      %v1094 = vsel %vm1093, %v1085, %v1090
      %v1095 = vrsqrt.pop %v1036
      %v1096 = vmul.f32 %v1095, %v1036
      %v1097 = vmul.f32 %v1096, %v1095
      %v1098 = vmul.f32 0.5, %v1097
      %v1099 = vsub.f32 1.5, %v1098
      %v1100 = vmul.f32 %v1095, %v1099
      %vm1101 = vweird.f32 %v1036
      %vm1102 = vweird.f32 %v1095
      %vm1103 = vmor %vm1101, %vm1102
      %v1104 = vsel %vm1103, %v1095, %v1100
      %v1105 = vrsqrt.pop %v1037
      %v1106 = vmul.f32 %v1105, %v1037
      %v1107 = vmul.f32 %v1106, %v1105
      %v1108 = vmul.f32 0.5, %v1107
      %v1109 = vsub.f32 1.5, %v1108
      %v1110 = vmul.f32 %v1105, %v1109
      %vm1111 = vweird.f32 %v1037
      %vm1112 = vweird.f32 %v1105
      %vm1113 = vmor %vm1111, %vm1112
      %v1114 = vsel %vm1113, %v1105, %v1110
      %v1115 = vrsqrt.pop %v1038
      %v1116 = vmul.f32 %v1115, %v1038
      %v1117 = vmul.f32 %v1116, %v1115
      %v1118 = vmul.f32 0.5, %v1117
      %v1119 = vsub.f32 1.5, %v1118
      %v1120 = vmul.f32 %v1115, %v1119
      %vm1121 = vweird.f32 %v1038
      %vm1122 = vweird.f32 %v1115
      %vm1123 = vmor %vm1121, %vm1122
      %v1124 = vsel %vm1123, %v1115, %v1120
      %v1125 = vrsqrt.pop %v1039
      %v1126 = vmul.f32 %v1125, %v1039
      %v1127 = vmul.f32 %v1126, %v1125
      %v1128 = vmul.f32 0.5, %v1127
      %v1129 = vsub.f32 1.5, %v1128
      %v1130 = vmul.f32 %v1125, %v1129
      %vm1131 = vweird.f32 %v1039
      %vm1132 = vweird.f32 %v1125
      %vm1133 = vmor %vm1131, %vm1132
      %v1134 = vsel %vm1133, %v1125, %v1130
      %v1135 = vrsqrt.pop %v1040
      %v1136 = vmul.f32 %v1135, %v1040
      %v1137 = vmul.f32 %v1136, %v1135
      %v1138 = vmul.f32 0.5, %v1137
      %v1139 = vsub.f32 1.5, %v1138
      %v1140 = vmul.f32 %v1135, %v1139
      %vm1141 = vweird.f32 %v1040
      %vm1142 = vweird.f32 %v1135
      %vm1143 = vmor %vm1141, %vm1142
      %v1144 = vsel %vm1143, %v1135, %v1140
      %v1145 = vrsqrt.pop %v1041
      %v1146 = vmul.f32 %v1145, %v1041
      %v1147 = vmul.f32 %v1146, %v1145
      %v1148 = vmul.f32 0.5, %v1147
      %v1149 = vsub.f32 1.5, %v1148
      %v1150 = vmul.f32 %v1145, %v1149
      %vm1151 = vweird.f32 %v1041
      %vm1152 = vweird.f32 %v1145
      %vm1153 = vmor %vm1151, %vm1152
      %v1154 = vsel %vm1153, %v1145, %v1150
      %v1155 = vrsqrt.pop %v1042
      %v1156 = vmul.f32 %v1155, %v1042
      %v1157 = vmul.f32 %v1156, %v1155
      %v1158 = vmul.f32 0.5, %v1157
      %v1159 = vsub.f32 1.5, %v1158
      %v1160 = vmul.f32 %v1155, %v1159
      %vm1161 = vweird.f32 %v1042
      %vm1162 = vweird.f32 %v1155
      %vm1163 = vmor %vm1161, %vm1162
      %v1164 = vsel %vm1163, %v1155, %v1160
      %v1165 = vrsqrt.pop %v1043
      %v1166 = vmul.f32 %v1165, %v1043
      %v1167 = vmul.f32 %v1166, %v1165
      %v1168 = vmul.f32 0.5, %v1167
      %v1169 = vsub.f32 1.5, %v1168
      %v1170 = vmul.f32 %v1165, %v1169
      %vm1171 = vweird.f32 %v1043
      %vm1172 = vweird.f32 %v1165
      %vm1173 = vmor %vm1171, %vm1172
      %v1174 = vsel %vm1173, %v1165, %v1170
      %v1175 = vrsqrt.pop %v1044
      %v1176 = vmul.f32 %v1175, %v1044
      %v1177 = vmul.f32 %v1176, %v1175
      %v1178 = vmul.f32 0.5, %v1177
      %v1179 = vsub.f32 1.5, %v1178
      %v1180 = vmul.f32 %v1175, %v1179
      %vm1181 = vweird.f32 %v1044
      %vm1182 = vweird.f32 %v1175
      %vm1183 = vmor %vm1181, %vm1182
      %v1184 = vsel %vm1183, %v1175, %v1180
      %v1185 = vrsqrt.pop %v1045
      %v1186 = vmul.f32 %v1185, %v1045
      %v1187 = vmul.f32 %v1186, %v1185
      %v1188 = vmul.f32 0.5, %v1187
      %v1189 = vsub.f32 1.5, %v1188
      %v1190 = vmul.f32 %v1185, %v1189
      %vm1191 = vweird.f32 %v1045
      %vm1192 = vweird.f32 %v1185
      %vm1193 = vmor %vm1191, %vm1192
      %v1194 = vsel %vm1193, %v1185, %v1190
      %v1195 = vrsqrt.pop %v1046
      %v1196 = vmul.f32 %v1195, %v1046
      %v1197 = vmul.f32 %v1196, %v1195
      %v1198 = vmul.f32 0.5, %v1197
      %v1199 = vsub.f32 1.5, %v1198
      %v1200 = vmul.f32 %v1195, %v1199
      %vm1201 = vweird.f32 %v1046
      %vm1202 = vweird.f32 %v1195
      %vm1203 = vmor %vm1201, %vm1202
      %v1204 = vsel %vm1203, %v1195, %v1200
      %v1205 = vrsqrt.pop %v1047
      %v1206 = vmul.f32 %v1205, %v1047
      %v1207 = vmul.f32 %v1206, %v1205
      %v1208 = vmul.f32 0.5, %v1207
      %v1209 = vsub.f32 1.5, %v1208
      %v1210 = vmul.f32 %v1205, %v1209
      %vm1211 = vweird.f32 %v1047
      %vm1212 = vweird.f32 %v1205
      %vm1213 = vmor %vm1211, %vm1212
      %v1214 = vsel %vm1213, %v1205, %v1210
      %v1215 = vrsqrt.pop %v1048
      %v1216 = vmul.f32 %v1215, %v1048
      %v1217 = vmul.f32 %v1216, %v1215
      %v1218 = vmul.f32 0.5, %v1217
      %v1219 = vsub.f32 1.5, %v1218
      %v1220 = vmul.f32 %v1215, %v1219
      %vm1221 = vweird.f32 %v1048
      %vm1222 = vweird.f32 %v1215
      %vm1223 = vmor %vm1221, %vm1222
      %v1224 = vsel %vm1223, %v1215, %v1220
      %v1225 = vmul.f32 %v1049, %v1074
      %v1226 = vmul.f32 %v1050, %v1084
      %v1227 = vmul.f32 %v1051, %v1094
      %v1228 = vmul.f32 %v1052, %v1104
      %v1229 = vmul.f32 %v1053, %v1114
      %v1230 = vmul.f32 %v1054, %v1124
      %v1231 = vmul.f32 %v1055, %v1134
      %v1232 = vmul.f32 %v1056, %v1144
      %v1233 = vmul.f32 %v1057, %v1154
      %v1234 = vmul.f32 %v1058, %v1164
      %v1235 = vmul.f32 %v1059, %v1174
      %v1236 = vmul.f32 %v1060, %v1184
      %v1237 = vmul.f32 %v1061, %v1194
      %v1238 = vmul.f32 %v1062, %v1204
      %v1239 = vmul.f32 %v1063, %v1214
      %v1240 = vmul.f32 %v1064, %v1224
      %vm1241 = vcmp.gt.f32.partialorder %v1225, 0.1
      %vm1242 = vcmp.gt.f32.partialorder %v1226, 0.1
      %vm1243 = vcmp.gt.f32.partialorder %v1227, 0.1
      %vm1244 = vcmp.gt.f32.partialorder %v1228, 0.1
      %vm1245 = vcmp.gt.f32.partialorder %v1229, 0.1
      %vm1246 = vcmp.gt.f32.partialorder %v1230, 0.1
      %vm1247 = vcmp.gt.f32.partialorder %v1231, 0.1
      %vm1248 = vcmp.gt.f32.partialorder %v1232, 0.1
      %vm1249 = vcmp.gt.f32.partialorder %v1233, 0.1
      %vm1250 = vcmp.gt.f32.partialorder %v1234, 0.1
      %vm1251 = vcmp.gt.f32.partialorder %v1235, 0.1
      %vm1252 = vcmp.gt.f32.partialorder %v1236, 0.1
      %vm1253 = vcmp.gt.f32.partialorder %v1237, 0.1
      %vm1254 = vcmp.gt.f32.partialorder %v1238, 0.1
      %vm1255 = vcmp.gt.f32.partialorder %v1239, 0.1
      %vm1256 = vcmp.gt.f32.partialorder %v1240, 0.1
      %v1257 = vsel %vm1241, %v1225, 0.0
      %v1258 = vsel %vm1242, %v1226, 0.0
      %v1259 = vsel %vm1243, %v1227, 0.0
      %v1260 = vsel %vm1244, %v1228, 0.0
      %v1261 = vsel %vm1245, %v1229, 0.0
      %v1262 = vsel %vm1246, %v1230, 0.0
      %v1263 = vsel %vm1247, %v1231, 0.0
      %v1264 = vsel %vm1248, %v1232, 0.0
      %v1265 = vsel %vm1249, %v1233, 0.0
      %v1266 = vsel %vm1250, %v1234, 0.0
      %v1267 = vsel %vm1251, %v1235, 0.0
      %v1268 = vsel %vm1252, %v1236, 0.0
      %v1269 = vsel %vm1253, %v1237, 0.0
      %v1270 = vsel %vm1254, %v1238, 0.0
      %v1271 = vsel %vm1255, %v1239, 0.0
      %v1272 = vsel %vm1256, %v1240, 0.0
      %1273 = vst [vmem:[%s200] sm:$0xff] %v1257
      %1274 = vst [vmem:[%s200 + $0x8] sm:$0xff] %v1258
      %1275 = vst [vmem:[%s200 + $0x10] sm:$0xff] %v1259
      %1276 = vst [vmem:[%s200 + $0x18] sm:$0xff] %v1260
      %1277 = vst [vmem:[%s200 + $0x20] sm:$0xff] %v1261
      %1278 = vst [vmem:[%s200 + $0x28] sm:$0xff] %v1262
      %1279 = vst [vmem:[%s200 + $0x30] sm:$0xff] %v1263
      %1280 = vst [vmem:[%s200 + $0x38] sm:$0xff] %v1264
      %1281 = vst [vmem:[%s200 + $0x40] sm:$0xff] %v1265
      %1282 = vst [vmem:[%s200 + $0x48] sm:$0xff] %v1266
      %1283 = vst [vmem:[%s200 + $0x50] sm:$0xff] %v1267
      %1284 = vst [vmem:[%s200 + $0x58] sm:$0xff] %v1268
      %1285 = vst [vmem:[%s200 + $0x60] sm:$0xff] %v1269
      %1286 = vst [vmem:[%s200 + $0x68] sm:$0xff] %v1270
      %1287 = vst [vmem:[%s200 + $0x70] sm:$0xff] %v1271
      %1288 = vst [vmem:[%s200 + $0x78] sm:$0xff] %v1272
      %v1289 = vld [vmem:[%s205] sm:$0xff]
      %v1290 = vld [vmem:[%s205 + $0x8] sm:$0xff]
      %v1291 = vld [vmem:[%s205 + $0x10] sm:$0xff]
      %v1292 = vld [vmem:[%s205 + $0x18] sm:$0xff]
      %v1293 = vld [vmem:[%s205 + $0x20] sm:$0xff]
      %v1294 = vld [vmem:[%s205 + $0x28] sm:$0xff]
      %v1295 = vld [vmem:[%s205 + $0x30] sm:$0xff]
      %v1296 = vld [vmem:[%s205 + $0x38] sm:$0xff]
      %v1297 = vld [vmem:[%s205 + $0x40] sm:$0xff]
      %v1298 = vld [vmem:[%s205 + $0x48] sm:$0xff]
      %v1299 = vld [vmem:[%s205 + $0x50] sm:$0xff]
      %v1300 = vld [vmem:[%s205 + $0x58] sm:$0xff]
      %v1301 = vld [vmem:[%s205 + $0x60] sm:$0xff]
      %v1302 = vld [vmem:[%s205 + $0x68] sm:$0xff]
      %v1303 = vld [vmem:[%s205 + $0x70] sm:$0xff]
      %v1304 = vld [vmem:[%s205 + $0x78] sm:$0xff]
      %v1305 = vmul.f32 %v1257, 0.33333334
      %v1306 = vmul.f32 %v1258, 0.33333334
      %v1307 = vmul.f32 %v1259, 0.33333334
      %v1308 = vmul.f32 %v1260, 0.33333334
      %v1309 = vmul.f32 %v1261, 0.33333334
      %v1310 = vmul.f32 %v1262, 0.33333334
      %v1311 = vmul.f32 %v1263, 0.33333334
      %v1312 = vmul.f32 %v1264, 0.33333334
      %v1313 = vmul.f32 %v1265, 0.33333334
      %v1314 = vmul.f32 %v1266, 0.33333334
      %v1315 = vmul.f32 %v1267, 0.33333334
      %v1316 = vmul.f32 %v1268, 0.33333334
      %v1317 = vmul.f32 %v1269, 0.33333334
      %v1318 = vmul.f32 %v1270, 0.33333334
      %v1319 = vmul.f32 %v1271, 0.33333334
      %v1320 = vmul.f32 %v1272, 0.33333334
      %v1321 = vadd.f32 %v1289, %v1305
      %v1322 = vadd.f32 %v1290, %v1306
      %v1323 = vadd.f32 %v1291, %v1307
      %v1324 = vadd.f32 %v1292, %v1308
      %v1325 = vadd.f32 %v1293, %v1309
      %v1326 = vadd.f32 %v1294, %v1310
      %v1327 = vadd.f32 %v1295, %v1311
      %v1328 = vadd.f32 %v1296, %v1312
      %v1329 = vadd.f32 %v1297, %v1313
      %v1330 = vadd.f32 %v1298, %v1314
      %v1331 = vadd.f32 %v1299, %v1315
      %v1332 = vadd.f32 %v1300, %v1316
      %v1333 = vadd.f32 %v1301, %v1317
      %v1334 = vadd.f32 %v1302, %v1318
      %v1335 = vadd.f32 %v1303, %v1319
      %v1336 = vadd.f32 %v1304, %v1320
      %1337 = vst [vmem:[%s205] sm:$0xff] %v1321
      %1338 = vst [vmem:[%s205 + $0x8] sm:$0xff] %v1322
      %1339 = vst [vmem:[%s205 + $0x10] sm:$0xff] %v1323
      %1340 = vst [vmem:[%s205 + $0x18] sm:$0xff] %v1324
      %1341 = vst [vmem:[%s205 + $0x20] sm:$0xff] %v1325
      %1342 = vst [vmem:[%s205 + $0x28] sm:$0xff] %v1326
      %1343 = vst [vmem:[%s205 + $0x30] sm:$0xff] %v1327
      %1344 = vst [vmem:[%s205 + $0x38] sm:$0xff] %v1328
      %1345 = vst [vmem:[%s205 + $0x40] sm:$0xff] %v1329
      %1346 = vst [vmem:[%s205 + $0x48] sm:$0xff] %v1330
      %1347 = vst [vmem:[%s205 + $0x50] sm:$0xff] %v1331
      %1348 = vst [vmem:[%s205 + $0x58] sm:$0xff] %v1332
      %1349 = vst [vmem:[%s205 + $0x60] sm:$0xff] %v1333
      %1350 = vst [vmem:[%s205 + $0x68] sm:$0xff] %v1334
      %1351 = vst [vmem:[%s205 + $0x70] sm:$0xff] %v1335
      %1352 = vst [vmem:[%s205 + $0x78] sm:$0xff] %v1336
      %p1353 = scmp.lt.s32.totalorder %s20, 2
      %s1354 = scalar_select %p1353, %s20, 2
      %p1355 = scmp.lt.s32.totalorder %s19, 1
      %s1356 = scalar_select %p1355, %s19, 1
      %s1357 = smul.addr %s1356, 16
      %s1358 = smul.addr %s1354, 32
      %s1359 = sadd.s32 %s1357, %s1358
      %s1360 = smul.addr %s1359, 8
      %s1361 = scalar_lea.vmem %s2, %s1360
      %p1362 = scmp.lt.s32.totalorder %s19, 1
      %s1363 = scalar_select %p1362, %s19, 1
      %s1364 = smul.addr %s1363, 16
      %s1365 = smul.addr %s1364, 8
      %s1366 = scalar_lea.vmem %s3, %s1365
      // Predicated region
      $region33: #{graph_learner_heads.1} parent=27 // pred_check
        %p1367 = pneg %p94
      $region34: #{graph_learner_heads.1} parent=27 // pred_check_branch
        %1369 = sbr.rel (%p1367) target = $region36
      $region35: #{graph_learner_heads.1} parent=27 // pred_region
        _
      $region36: #{graph_learner_heads.1} parent=27 // pred_fallthru
        _
      // Predicated region
      $region37: #{graph_learner_heads.1} parent=27 // pred_check
        %p1370 = pneg %p120
      $region38: #{graph_learner_heads.1} parent=27 // pred_check_branch
        %1372 = sbr.rel (%p1370) target = $region40
      $region39: #{graph_learner_heads.1} parent=27 // pred_region
        _
      $region40: #{graph_learner_heads.1} parent=27 // pred_fallthru
        _
    $region28: #{graph_learner_heads.1} parent=5 // pred_fallthru
      _
    %p1373 = scmp.le.s32.totalorder 2, %s10
    // Predicated region
    $region41: #{graph_learner_heads.1} parent=5 // pred_check
      %p1374 = pneg %p1373
    $region42: #{graph_learner_heads.1} parent=5 // pred_check_branch
      %1376 = sbr.rel (%p1374) target = $region44
    $region43: #{graph_learner_heads.1} parent=5 // pred_region
      %s1377 = ssub.s32 %s10, 2
      // Predicated region
      $region45: #{graph_learner_heads.1} parent=43 // pred_check
        %p1378 = pneg %p100
      $region46: #{graph_learner_heads.1} parent=43 // pred_check_branch
        %1380 = sbr.rel (%p1378) target = $region48
      $region47: #{graph_learner_heads.1} parent=43 // pred_region
        %p1381 = scmp.lt.s32.totalorder %s22, 2
        %s1382 = scalar_select %p1381, %s22, 2
        %p1383 = scmp.lt.s32.totalorder %s21, 1
        %s1384 = scalar_select %p1383, %s21, 1
        %s1385 = smul.addr %s1384, 16
        %s1386 = smul.addr %s1382, 32
        %s1387 = sadd.s32 %s1385, %s1386
        %s1388 = smul.addr %s1387, 8
        %s1389 = scalar_lea.vmem %s2, %s1388
      $region48: #{graph_learner_heads.1} parent=43 // pred_fallthru
        _
      // Predicated region
      $region49: #{graph_learner_heads.1} parent=43 // pred_check
        %p1390 = pneg %p126
      $region50: #{graph_learner_heads.1} parent=43 // pred_check_branch
        %1392 = sbr.rel (%p1390) target = $region52
      $region51: #{graph_learner_heads.1} parent=43 // pred_region
        %p1393 = scmp.lt.s32.totalorder %s21, 1
        %s1394 = scalar_select %p1393, %s21, 1
        %s1395 = smul.addr %s1394, 16
        %s1396 = smul.addr %s1395, 8
        %s1397 = scalar_lea.vmem %s3, %s1396
      $region52: #{graph_learner_heads.1} parent=43 // pred_fallthru
        _
    $region44: #{graph_learner_heads.1} parent=5 // pred_fallthru
      _
  $region6: #{graph_learner_heads.1} parent=0 // loop_footer
    %s14 = sadd.s32 1, %s10
  $region7: #{graph_learner_heads.1} parent=0 // loop_footer_branch
    %9 = sbr.rel target = $region3
  $region8: #{graph_learner_heads.1} parent=0 // loop_exit
    _

</llo_original>
